<compile_context>
chip_gen: v6e
topology: v6e:2x2x1
jax: 0.10.0
libtpu: 0.0.40
codegen_flags: <defaults>
</compile_context>

<pallas_src>
import jax
import jax.numpy as jnp
from jax.experimental import pallas as pl
from jax.experimental.pallas import tpu as pltpu

LANE = 128  # TPU lane width


# ---------------------------------------------------------------------------
# Kernels
# ---------------------------------------------------------------------------
def _head_mlp_kernel_bf16(x_ref, w1_ref, b1_ref, w2_ref, b2_ref, o_ref):
    """bf16 elementwise path (v6e / v7x: native bf16 VPU)."""
    # x_ref:  (TN, D)    f32 tile -> cast in-kernel (VPU work hidden under MXU)
    # w1_ref: (D, H)     bf16 resident hidden weight
    # b1_ref: (1, H)     f32
    # w2_ref: (H, Cpad)  bf16 resident classifier weight (lane-padded)
    # b2_ref: (1, Cpad)  f32 (lane-padded)
    # o_ref:  (TN, Cpad) f32 lane-dense logits
    x = x_ref[...].astype(jnp.bfloat16)
    h = jnp.dot(x, w1_ref[...], preferred_element_type=jnp.float32)
    # bf16 bias + LeakyReLU(0.1): halves elementwise traffic of the (TN, 1024)
    # hidden activation and removes the separate f32->bf16 cast pass.
    h = h.astype(jnp.bfloat16) + b1_ref[...].astype(jnp.bfloat16)
    h = jnp.maximum(h, h * jnp.bfloat16(0.1))
    o = jnp.dot(h, w2_ref[...], preferred_element_type=jnp.float32)
    o_ref[...] = (o + b2_ref[...]).astype(o_ref.dtype)


def _head_mlp_kernel_f32(x_ref, w1_ref, b1_ref, w2_ref, b2_ref, o_ref):
    """f32 elementwise path (v5e: no bf16 VALU)."""
    x = x_ref[...].astype(jnp.bfloat16)
    h = jnp.dot(x, w1_ref[...], preferred_element_type=jnp.float32)
    h = h + b1_ref[...]
    h = jnp.maximum(h, 0.1 * h)                    # LeakyReLU(0.1), one VPU op
    o = jnp.dot(h.astype(jnp.bfloat16), w2_ref[...],
                preferred_element_type=jnp.float32)
    o_ref[...] = (o + b2_ref[...]).astype(o_ref.dtype)


# ---------------------------------------------------------------------------
# One-time parameter preparation (hoisted out of the per-call forward)
# ---------------------------------------------------------------------------
def prepare_head_params(w1, b1, w2, b2):
    """bf16 matmul weights, f32 biases, classifier lane-padded to 128."""
    h, c = w2.shape
    c_pad = pl.cdiv(c, LANE) * LANE
    w2p = jnp.zeros((h, c_pad), jnp.bfloat16).at[:, :c].set(w2.astype(jnp.bfloat16))
    b2p = jnp.zeros((1, c_pad), jnp.float32).at[:, :c].set(
        jnp.reshape(b2, (1, c)).astype(jnp.float32))
    return {
        "w1": w1.astype(jnp.bfloat16),
        "b1": jnp.reshape(b1, (1, -1)).astype(jnp.float32),
        "w2": w2p,
        "b2": b2p,
        "num_classes": int(c),   # Python static; keep the lane-slice shape static
    }


def _default_bf16_elementwise():
    # v6e / v7x have a bf16 VPU; older generations (v2-v5) keep the f32 path.
    try:
        kind = jax.devices()[0].device_kind.lower()
        return not any(s in kind for s in ("v2", "v3", "v4", "v5"))
    except Exception:  # pragma: no cover
        return True


def _choose_tile_n(n, tile_n):
    """Row-tile selection: big tiles to amortize grid-step overhead, rounded to
    sublane multiples, and >=2 grid steps when there is enough work so a v7x
    megacore can shard the parallel axis across both TensorCores."""
    tile_n = max(8, (tile_n // 8) * 8)
    if n > tile_n:
        return tile_n
    if n >= 512:
        return pl.cdiv(pl.cdiv(n, 2), 8) * 8   # split into ~2 tiles
    return min(tile_n, pl.cdiv(n, 8) * 8)      # single small tile


# ---------------------------------------------------------------------------
# Head MLP wrapper
# ---------------------------------------------------------------------------
def head_mlp(x, params, *, tile_n=1024, bf16_elementwise=None):
    """x: [N, D] f32 point features; returns [N, num_classes] f32 logits."""
    n, d = x.shape
    w1, b1, w2, b2 = params["w1"], params["b1"], params["w2"], params["b2"]
    c = params["num_classes"]
    hdim = w1.shape[1]
    c_pad = w2.shape[1]

    if bf16_elementwise is None:
        bf16_elementwise = _default_bf16_elementwise()
    kernel = _head_mlp_kernel_bf16 if bf16_elementwise else _head_mlp_kernel_f32

    tn = _choose_tile_n(n, tile_n)
    grid_steps = pl.cdiv(n, tn)

    # Note on MXU utilization (v6e/v7x): K=D and N=c_pad are 128, filling only
    # half of the 256x256 MXU; the lever is the large row tile, not padding c.
    flops = 2 * grid_steps * tn * (d * hdim + hdim * c_pad)
    bytes_accessed = (n * d * 4 + w1.size * 2 + b1.size * 4
                      + w2.size * 2 + b2.size * 4 + n * c_pad * 4)

    out = pl.pallas_call(
        kernel,
        out_shape=jax.ShapeDtypeStruct((n, c_pad), jnp.float32),
        grid_spec=pl.GridSpec(
            grid=(grid_steps,),
            in_specs=[
                pl.BlockSpec((tn, d), lambda i: (i, 0)),       # f32 x tile
                pl.BlockSpec((d, hdim), lambda i: (0, 0)),     # resident w1 (bf16)
                pl.BlockSpec((1, hdim), lambda i: (0, 0)),     # resident b1 (f32)
                pl.BlockSpec((hdim, c_pad), lambda i: (0, 0)), # resident w2 (bf16, padded)
                pl.BlockSpec((1, c_pad), lambda i: (0, 0)),    # resident b2 (f32, padded)
            ],
            out_specs=pl.BlockSpec((tn, c_pad), lambda i: (i, 0)),
        ),
        compiler_params=pltpu.CompilerParams(
            dimension_semantics=("parallel",),
        ),
        cost_estimate=pl.CostEstimate(
            flops=flops, transcendentals=0, bytes_accessed=bytes_accessed),
    )(x, w1, b1, w2, b2)

    # Strip lane padding only (no row padding was materialized).
    return out[:, :c]


def kpsnet_forward(features, params):
    """KPSNet.forward without the (unavailable) block_decider backbone.

    features: [N, out_dim] point features (post-backbone feature dimension).
    Returns:  [N, num_classes] logits from head_mlp.
    """
    # TODO(synk): apply block_ops here once block_decider semantics are
    # available; ideally fuse the last block into the same pallas_call so point
    # features stay in VMEM across backbone -> head.
    return head_mlp(features, params)


def init_linear(key, fan_in, fan_out, dtype=jnp.float32):
    """Deterministic init matching torch.nn.Linear default scale:
    U(-1/sqrt(fan_in), 1/sqrt(fan_in)) for both weight and bias."""
    kw, kb = jax.random.split(key)
    bound = 1.0 / jnp.sqrt(jnp.asarray(fan_in, dtype))
    w = jax.random.uniform(kw, (fan_in, fan_out), dtype, minval=-bound, maxval=bound)
    b = jax.random.uniform(kb, (1, fan_out), dtype, minval=-bound, maxval=bound)
    return w, b


if __name__ == "__main__":
    # Small, deterministic synthetic config:
    #   final backbone feature dim (out_dim) = 128, hidden = 1024 (fixed in the
    #   module), num_classes = 8, N = 200 points (exercises the partial-tile path).
    N = 200
    OUT_DIM = 128
    HIDDEN = 1024
    NUM_CLASSES = 8

    key = jax.random.PRNGKey(0)
    k_x, k_l1, k_l2 = jax.random.split(key, 3)

    x = jax.random.normal(k_x, (N, OUT_DIM), jnp.float32)
    w1, b1 = init_linear(k_l1, OUT_DIM, HIDDEN)
    w2, b2 = init_linear(k_l2, HIDDEN, NUM_CLASSES)

    # One-time parameter prep (bf16 casts + lane padding) outside the forward.
    params = prepare_head_params(w1, b1, w2, b2)

    fwd = jax.jit(lambda feats: kpsnet_forward(feats, params))
    logits = jax.block_until_ready(fwd(x))
    assert logits.shape == (N, NUM_CLASSES)

    # Pure-JAX reference mirroring the kernel's bf16-operand / f32-accumulate
    # math (tolerance covers bf16 matmul inputs + optional bf16 elementwise).
    h_ref = jnp.dot(x.astype(jnp.bfloat16), w1.astype(jnp.bfloat16),
                    preferred_element_type=jnp.float32) + b1
    h_ref = jnp.maximum(h_ref, 0.1 * h_ref)
    ref = jnp.dot(h_ref.astype(jnp.bfloat16), w2.astype(jnp.bfloat16),
                  preferred_element_type=jnp.float32) + b2
    max_err = float(jnp.max(jnp.abs(logits - ref)))
    assert jnp.allclose(logits, ref, atol=5e-2, rtol=5e-2), max_err

    print("KERNEL_OK")
</pallas_src>

<mosaic_0001>
module attributes {stable_mosaic.version = 11 : i64} {
  func.func @_head_mlp_kernel_bf16(%arg0: i32, %arg1: memref<200x128xf32, #tpu.memory_space<vmem>>, %arg2: memref<128x1024xbf16, #tpu.memory_space<vmem>>, %arg3: memref<1x1024xf32, #tpu.memory_space<vmem>>, %arg4: memref<1024x128xbf16, #tpu.memory_space<vmem>>, %arg5: memref<1x128xf32, #tpu.memory_space<vmem>>, %arg6: memref<200x128xf32, #tpu.memory_space<vmem>>) attributes {dimension_semantics = [#tpu.dimension_semantics<parallel>], iteration_bounds = array<i64: 1>, scalar_prefetch = 0 : i64, scratch_operands = 0 : i64, tpu.core_type = #tpu.core_type<tc>, window_params = [{transform_indices = @transform_0, window_bounds = array<i64: 200, 128>}, {pipeline_mode = #tpu.pipeline_mode<synchronous>, transform_indices = @transform_1, window_bounds = array<i64: 128, 1024>}, {pipeline_mode = #tpu.pipeline_mode<synchronous>, transform_indices = @transform_2, window_bounds = array<i64: 1, 1024>}, {pipeline_mode = #tpu.pipeline_mode<synchronous>, transform_indices = @transform_3, window_bounds = array<i64: 1024, 128>}, {pipeline_mode = #tpu.pipeline_mode<synchronous>, transform_indices = @transform_4, window_bounds = array<i64: 1, 128>}, {transform_indices = @transform_5, window_bounds = array<i64: 200, 128>}]} {
    %c0 = arith.constant 0 : index
    %c0_0 = arith.constant 0 : index
    %0 = vector.load %arg1[%c0, %c0_0] : memref<200x128xf32, #tpu.memory_space<vmem>>, vector<200x128xf32>
    %1 = arith.truncf %0 : vector<200x128xf32> to vector<200x128xbf16>
    %c0_1 = arith.constant 0 : index
    %c0_2 = arith.constant 0 : index
    %2 = vector.load %arg2[%c0_1, %c0_2] : memref<128x1024xbf16, #tpu.memory_space<vmem>>, vector<128x1024xbf16>
    %cst = arith.constant dense<0.000000e+00> : vector<200x1024xf32>
    %3 = tpu.matmul %1, %2, %cst {dimension_numbers = #tpu.dot_dimension_numbers<[1], [0], [0], [1], [0, 0, 1, 1], [], []>} : vector<200x128xbf16>, vector<128x1024xbf16>, vector<200x1024xf32> -> vector<200x1024xf32>
    %4 = arith.truncf %3 : vector<200x1024xf32> to vector<200x1024xbf16>
    %c0_3 = arith.constant 0 : index
    %c0_4 = arith.constant 0 : index
    %5 = vector.load %arg3[%c0_3, %c0_4] : memref<1x1024xf32, #tpu.memory_space<vmem>>, vector<1x1024xf32>
    %6 = arith.truncf %5 : vector<1x1024xf32> to vector<1x1024xbf16>
    %7 = vector.broadcast %6 : vector<1x1024xbf16> to vector<200x1024xbf16>
    %8 = arith.addf %4, %7 : vector<200x1024xbf16>
    %cst_5 = arith.constant 1.000980e-01 : bf16
    %9 = vector.broadcast %cst_5 : bf16 to vector<200x1024xbf16>
    %10 = arith.mulf %8, %9 : vector<200x1024xbf16>
    %11 = arith.maximumf %8, %10 : vector<200x1024xbf16>
    %c0_6 = arith.constant 0 : index
    %c0_7 = arith.constant 0 : index
    %12 = vector.load %arg4[%c0_6, %c0_7] : memref<1024x128xbf16, #tpu.memory_space<vmem>>, vector<1024x128xbf16>
    %cst_8 = arith.constant dense<0.000000e+00> : vector<200x128xf32>
    %13 = tpu.matmul %11, %12, %cst_8 {dimension_numbers = #tpu.dot_dimension_numbers<[1], [0], [0], [1], [0, 0, 1, 1], [], []>} : vector<200x1024xbf16>, vector<1024x128xbf16>, vector<200x128xf32> -> vector<200x128xf32>
    %c0_9 = arith.constant 0 : index
    %c0_10 = arith.constant 0 : index
    %14 = vector.load %arg5[%c0_9, %c0_10] : memref<1x128xf32, #tpu.memory_space<vmem>>, vector<1x128xf32>
    %15 = vector.broadcast %14 : vector<1x128xf32> to vector<200x128xf32>
    %16 = arith.addf %13, %15 : vector<200x128xf32>
    %c0_11 = arith.constant 0 : index
    %c0_12 = arith.constant 0 : index
    %17 = vector.load %arg6[%c0_11, %c0_12] : memref<200x128xf32, #tpu.memory_space<vmem>>, vector<200x128xf32>
    tpu.vector_store %arg6[%c0_11, %c0_12], %16 {strides = array<i32>} : memref<200x128xf32, #tpu.memory_space<vmem>>, vector<200x128xf32>,
    return
  }
  func.func @transform_0(%arg0: i32) -> (i32, i32) {
    %c0_i32 = arith.constant 0 : i32
    %c0_i32_0 = arith.constant 0 : i32
    return %arg0, %c0_i32 : i32, i32
  }
  func.func @transform_1(%arg0: i32) -> (i32, i32) {
    %c0_i32 = arith.constant 0 : i32
    %c0_i32_0 = arith.constant 0 : i32
    %c0_i32_1 = arith.constant 0 : i32
    return %c0_i32, %c0_i32_0 : i32, i32
  }
  func.func @transform_2(%arg0: i32) -> (i32, i32) {
    %c0_i32 = arith.constant 0 : i32
    %c0_i32_0 = arith.constant 0 : i32
    %c0_i32_1 = arith.constant 0 : i32
    return %c0_i32, %c0_i32_0 : i32, i32
  }
  func.func @transform_3(%arg0: i32) -> (i32, i32) {
    %c0_i32 = arith.constant 0 : i32
    %c0_i32_0 = arith.constant 0 : i32
    %c0_i32_1 = arith.constant 0 : i32
    return %c0_i32, %c0_i32_0 : i32, i32
  }
  func.func @transform_4(%arg0: i32) -> (i32, i32) {
    %c0_i32 = arith.constant 0 : i32
    %c0_i32_0 = arith.constant 0 : i32
    %c0_i32_1 = arith.constant 0 : i32
    return %c0_i32, %c0_i32_0 : i32, i32
  }
  func.func @transform_5(%arg0: i32) -> (i32, i32) {
    %c0_i32 = arith.constant 0 : i32
    %c0_i32_0 = arith.constant 0 : i32
    return %arg0, %c0_i32 : i32, i32
  }
}

</mosaic_0001>

<llo_original>
// kernel: _lambda_.1
$region0: #{_lambda_.1}
  #allocation0 [shape = 'u32[]', space=smem, size = 0x4, offset = 0x4, fixed_abs, tag = 'smem constant byte address 0x4 - core index']
  #allocation1 [shape = 'u32[144,128]{1,0:T(1,128)}', space=vmem, size = 0x12000, scoped, tag = 'internal scratch']
  %s0 = inlined_call_operand.hbm [shape: f32[200,128], index: 0, kind: input, shape index: {}]
  %s1 = inlined_call_operand.hbm [shape: bf16[128,1024], index: 1, kind: input, shape index: {}]
  %s2 = inlined_call_operand.hbm [shape: f32[1,1024], index: 2, kind: input, shape index: {}]
  %s3 = inlined_call_operand.hbm [shape: bf16[1024,128], index: 3, kind: input, shape index: {}]
  %s4 = inlined_call_operand.vmem [shape: f32[1,128], index: 4, kind: input, shape index: {}]
  %s5 = inlined_call_operand.vmem [shape: f32[200,128], index: 5, kind: output, shape index: {}]
  %s6 = sld [smem:[#allocation0]]
  $region46: #{_lambda_.1} parent=0
    _
  %s8 = ssub.s32 1, %s6
  %s9 = scalar_select 0, %s8, %s6
  $region1: #{_lambda_.1} parent=0
    #allocation2 [shape = 'u8[102400]{0}', space=vmem, size = 0x19000, scoped, tag = 'input window, operand 0, single buffered']
    #allocation3 [shape = 's32[1]{0}', space=sflag, size = 0x4, scoped, tag = 'scoped memory for _lambda_.1']
    #allocation4 [shape = 'u8[262144]{0}', space=vmem, size = 0x40000, scoped, tag = 'input window, operand 1, single buffered']
    #allocation5 [shape = 's32[1]{0}', space=sflag, size = 0x4, scoped, tag = 'scoped memory for _lambda_.1']
    #allocation6 [shape = 'u8[4096]{0}', space=vmem, size = 0x1000, scoped, tag = 'input window, operand 2, single buffered']
    #allocation7 [shape = 'u8[262144]{0}', space=vmem, size = 0x40000, scoped, tag = 'input window, operand 3, single buffered']
    #allocation8 [shape = 's32[1]{0}', space=sflag, size = 0x4, scoped, tag = 'scoped memory for _lambda_.1']
    %10 = vsyncpa [#allocation3], 0
    %11 = vsyncpa [#allocation5], 0
    %12 = vsyncpa [#allocation8], 0
    // Predicated region
    $region2: #{_lambda_.1} parent=1 // pred_check
      _
    $region3: #{_lambda_.1} parent=1 // pred_check_branch
      %14 = sbr.rel (0) target = $region5
    $region4: #{_lambda_.1} parent=1 // pred_region
      %s16 = ssub.s32 3200, 3200
      %17 = vsyncadd [#allocation3], %s16
      %s18 = sshll.u32 [#allocation2], 4
      %s19 = int_to_ptr.vmem [resolvable:$true] %s18
      %24 = dma.hbm_to_vmem [thread:$0]  %s0, 3200, %s19, [#allocation3], 128, 128, 8
    $region5: #{_lambda_.1} parent=1 // pred_fallthru
      _
    // Predicated region
    $region6: #{_lambda_.1} parent=1 // pred_check
      _
    $region7: #{_lambda_.1} parent=1 // pred_check_branch
      %26 = sbr.rel (0) target = $region9
    $region8: #{_lambda_.1} parent=1 // pred_region
      %s28 = ssub.s32 8192, 8192
      %29 = vsyncadd [#allocation5], %s28
      %s30 = sshll.u32 [#allocation4], 4
      %s31 = int_to_ptr.vmem [resolvable:$true] %s30
      %36 = dma.hbm_to_vmem [thread:$0]  %s1, 8192, %s31, [#allocation5], 512, 512, 32
    $region9: #{_lambda_.1} parent=1 // pred_fallthru
      _
    // Predicated region
    $region10: #{_lambda_.1} parent=1 // pred_check
      _
    $region11: #{_lambda_.1} parent=1 // pred_check_branch
      %38 = sbr.rel (0) target = $region13
    $region12: #{_lambda_.1} parent=1 // pred_region
      %s40 = ssub.s32 128, 128
      %41 = vsyncadd [#allocation5], %s40
      %s43 = sshll.u32 [#allocation6], 4
      %s44 = int_to_ptr.vmem [resolvable:$true] %s43
      %46 = dma.hbm_to_vmem [thread:$0]  %s2, 128, %s44, [#allocation5]
    $region13: #{_lambda_.1} parent=1 // pred_fallthru
      _
    // Predicated region
    $region14: #{_lambda_.1} parent=1 // pred_check
      _
    $region15: #{_lambda_.1} parent=1 // pred_check_branch
      %48 = sbr.rel (0) target = $region17
    $region16: #{_lambda_.1} parent=1 // pred_region
      %s50 = ssub.s32 8192, 8192
      %51 = vsyncadd [#allocation8], %s50
      %s52 = sshll.u32 [#allocation7], 4
      %s53 = int_to_ptr.vmem [resolvable:$true] %s52
      %58 = dma.hbm_to_vmem [thread:$0]  %s3, 8192, %s53, [#allocation8], 64, 64, 4
    $region17: #{_lambda_.1} parent=1 // pred_fallthru
      _
    // Predicated region
    $region18: #{_lambda_.1} parent=1 // pred_check
      _
    $region19: #{_lambda_.1} parent=1 // pred_check_branch
      %60 = sbr.rel (0) target = $region21
    $region20: #{_lambda_.1} parent=1 // pred_region
      _
    $region21: #{_lambda_.1} parent=1 // pred_fallthru
      _
    // Predicated region
    $region22: #{_lambda_.1} parent=1 // pred_check
      _
    $region23: #{_lambda_.1} parent=1 // pred_check_branch
      %62 = sbr.rel (0) target = $region25
    $region24: #{_lambda_.1} parent=1 // pred_region
      %63 = dma.done [#allocation3], 3200
    $region25: #{_lambda_.1} parent=1 // pred_fallthru
      _
    // Predicated region
    $region26: #{_lambda_.1} parent=1 // pred_check
      _
    $region27: #{_lambda_.1} parent=1 // pred_check_branch
      %65 = sbr.rel (0) target = $region29
    $region28: #{_lambda_.1} parent=1 // pred_region
      %66 = dma.done [#allocation5], 8192
    $region29: #{_lambda_.1} parent=1 // pred_fallthru
      _
    // Predicated region
    $region30: #{_lambda_.1} parent=1 // pred_check
      _
    $region31: #{_lambda_.1} parent=1 // pred_check_branch
      %68 = sbr.rel (0) target = $region33
    $region32: #{_lambda_.1} parent=1 // pred_region
      %69 = dma.done [#allocation5], 128
    $region33: #{_lambda_.1} parent=1 // pred_fallthru
      _
    // Predicated region
    $region34: #{_lambda_.1} parent=1 // pred_check
      _
    $region35: #{_lambda_.1} parent=1 // pred_check_branch
      %71 = sbr.rel (0) target = $region37
    $region36: #{_lambda_.1} parent=1 // pred_region
      %72 = dma.done [#allocation8], 8192
    $region37: #{_lambda_.1} parent=1 // pred_fallthru
      _
    %v75 = vld [vmem:[#allocation2] sm:$0xff]
    %v76 = vld [vmem:[#allocation2 + $0x8] sm:$0xff]
    %v77 = vld [vmem:[#allocation2 + $0x10] sm:$0xff]
    %v78 = vld [vmem:[#allocation2 + $0x18] sm:$0xff]
    %v79 = vld [vmem:[#allocation2 + $0x20] sm:$0xff]
    %v80 = vld [vmem:[#allocation2 + $0x28] sm:$0xff]
    %v81 = vld [vmem:[#allocation2 + $0x30] sm:$0xff]
    %v82 = vld [vmem:[#allocation2 + $0x38] sm:$0xff]
    %v83 = vld [vmem:[#allocation2 + $0x40] sm:$0xff]
    %v84 = vld [vmem:[#allocation2 + $0x48] sm:$0xff]
    %v85 = vld [vmem:[#allocation2 + $0x50] sm:$0xff]
    %v86 = vld [vmem:[#allocation2 + $0x58] sm:$0xff]
    %v87 = vld [vmem:[#allocation2 + $0x60] sm:$0xff]
    %v88 = vld [vmem:[#allocation2 + $0x68] sm:$0xff]
    %v89 = vld [vmem:[#allocation2 + $0x70] sm:$0xff]
    %v90 = vld [vmem:[#allocation2 + $0x78] sm:$0xff]
    %v91 = vld [vmem:[#allocation2 + $0x80] sm:$0xff]
    %v92 = vld [vmem:[#allocation2 + $0x88] sm:$0xff]
    %v93 = vld [vmem:[#allocation2 + $0x90] sm:$0xff]
    %v94 = vld [vmem:[#allocation2 + $0x98] sm:$0xff]
    %v95 = vld [vmem:[#allocation2 + $0xa0] sm:$0xff]
    %v96 = vld [vmem:[#allocation2 + $0xa8] sm:$0xff]
    %v97 = vld [vmem:[#allocation2 + $0xb0] sm:$0xff]
    %v98 = vld [vmem:[#allocation2 + $0xb8] sm:$0xff]
    %v99 = vld [vmem:[#allocation2 + $0xc0] sm:$0xff]
    %v100 = vpack.c.bf16 %v76, %v75
    %v101 = vpack.c.bf16 %v78, %v77
    %v102 = vpack.c.bf16 %v80, %v79
    %v103 = vpack.c.bf16 %v82, %v81
    %v104 = vpack.c.bf16 %v84, %v83
    %v105 = vpack.c.bf16 %v86, %v85
    %v106 = vpack.c.bf16 %v88, %v87
    %v107 = vpack.c.bf16 %v90, %v89
    %v108 = vpack.c.bf16 %v92, %v91
    %v109 = vpack.c.bf16 %v94, %v93
    %v110 = vpack.c.bf16 %v96, %v95
    %v111 = vpack.c.bf16 %v98, %v97
    %v112 = vpack.c.bf16 %v99, %v99
    %v113 = vld [vmem:[#allocation4] sm:$0xff]
    %v114 = vld [vmem:[#allocation4 + $0x8] sm:$0xff]
    %v115 = vld [vmem:[#allocation4 + $0x10] sm:$0xff]
    %v116 = vld [vmem:[#allocation4 + $0x18] sm:$0xff]
    %v117 = vld [vmem:[#allocation4 + $0x20] sm:$0xff]
    %v118 = vld [vmem:[#allocation4 + $0x28] sm:$0xff]
    %v119 = vld [vmem:[#allocation4 + $0x30] sm:$0xff]
    %v120 = vld [vmem:[#allocation4 + $0x38] sm:$0xff]
    %v121 = vld [vmem:[#allocation4 + $0x40] sm:$0xff]
    %v122 = vld [vmem:[#allocation4 + $0x48] sm:$0xff]
    %v123 = vld [vmem:[#allocation4 + $0x50] sm:$0xff]
    %v124 = vld [vmem:[#allocation4 + $0x58] sm:$0xff]
    %v125 = vld [vmem:[#allocation4 + $0x60] sm:$0xff]
    %v126 = vld [vmem:[#allocation4 + $0x68] sm:$0xff]
    %v127 = vld [vmem:[#allocation4 + $0x70] sm:$0xff]
    %v128 = vld [vmem:[#allocation4 + $0x78] sm:$0xff]
    %v129 = vld [vmem:[#allocation4 + $0x80] sm:$0xff]
    %v130 = vld [vmem:[#allocation4 + $0x88] sm:$0xff]
    %v131 = vld [vmem:[#allocation4 + $0x90] sm:$0xff]
    %v132 = vld [vmem:[#allocation4 + $0x98] sm:$0xff]
    %v133 = vld [vmem:[#allocation4 + $0xa0] sm:$0xff]
    %v134 = vld [vmem:[#allocation4 + $0xa8] sm:$0xff]
    %v135 = vld [vmem:[#allocation4 + $0xb0] sm:$0xff]
    %v136 = vld [vmem:[#allocation4 + $0xb8] sm:$0xff]
    %v137 = vld [vmem:[#allocation4 + $0xc0] sm:$0xff]
    %v138 = vld [vmem:[#allocation4 + $0xc8] sm:$0xff]
    %v139 = vld [vmem:[#allocation4 + $0xd0] sm:$0xff]
    %v140 = vld [vmem:[#allocation4 + $0xd8] sm:$0xff]
    %v141 = vld [vmem:[#allocation4 + $0xe0] sm:$0xff]
    %v142 = vld [vmem:[#allocation4 + $0xe8] sm:$0xff]
    %v143 = vld [vmem:[#allocation4 + $0xf0] sm:$0xff]
    %v144 = vld [vmem:[#allocation4 + $0xf8] sm:$0xff]
    %v145 = vld [vmem:[#allocation4 + $0x100] sm:$0xff]
    %v146 = vld [vmem:[#allocation4 + $0x108] sm:$0xff]
    %v147 = vld [vmem:[#allocation4 + $0x110] sm:$0xff]
    %v148 = vld [vmem:[#allocation4 + $0x118] sm:$0xff]
    %v149 = vld [vmem:[#allocation4 + $0x120] sm:$0xff]
    %v150 = vld [vmem:[#allocation4 + $0x128] sm:$0xff]
    %v151 = vld [vmem:[#allocation4 + $0x130] sm:$0xff]
    %v152 = vld [vmem:[#allocation4 + $0x138] sm:$0xff]
    %v153 = vld [vmem:[#allocation4 + $0x140] sm:$0xff]
    %v154 = vld [vmem:[#allocation4 + $0x148] sm:$0xff]
    %v155 = vld [vmem:[#allocation4 + $0x150] sm:$0xff]
    %v156 = vld [vmem:[#allocation4 + $0x158] sm:$0xff]
    %v157 = vld [vmem:[#allocation4 + $0x160] sm:$0xff]
    %v158 = vld [vmem:[#allocation4 + $0x168] sm:$0xff]
    %v159 = vld [vmem:[#allocation4 + $0x170] sm:$0xff]
    %v160 = vld [vmem:[#allocation4 + $0x178] sm:$0xff]
    %v161 = vld [vmem:[#allocation4 + $0x180] sm:$0xff]
    %v162 = vld [vmem:[#allocation4 + $0x188] sm:$0xff]
    %v163 = vld [vmem:[#allocation4 + $0x190] sm:$0xff]
    %v164 = vld [vmem:[#allocation4 + $0x198] sm:$0xff]
    %v165 = vld [vmem:[#allocation4 + $0x1a0] sm:$0xff]
    %v166 = vld [vmem:[#allocation4 + $0x1a8] sm:$0xff]
    %v167 = vld [vmem:[#allocation4 + $0x1b0] sm:$0xff]
    %v168 = vld [vmem:[#allocation4 + $0x1b8] sm:$0xff]
    %v169 = vld [vmem:[#allocation4 + $0x1c0] sm:$0xff]
    %v170 = vld [vmem:[#allocation4 + $0x1c8] sm:$0xff]
    %v171 = vld [vmem:[#allocation4 + $0x1d0] sm:$0xff]
    %v172 = vld [vmem:[#allocation4 + $0x1d8] sm:$0xff]
    %v173 = vld [vmem:[#allocation4 + $0x1e0] sm:$0xff]
    %v174 = vld [vmem:[#allocation4 + $0x1e8] sm:$0xff]
    %v175 = vld [vmem:[#allocation4 + $0x1f0] sm:$0xff]
    %v176 = vld [vmem:[#allocation4 + $0x1f8] sm:$0xff]
    %v241 = vunpack.c.l.b16 %v113
    %v242 = vunpack.c.h.b16 %v113
    %v243 = vunpack.c.l.b16 %v114
    %v244 = vunpack.c.h.b16 %v114
    %v245 = vunpack.c.l.b16 %v115
    %v246 = vunpack.c.h.b16 %v115
    %v247 = vunpack.c.l.b16 %v116
    %v248 = vunpack.c.h.b16 %v116
    %v249 = vunpack.c.l.b16 %v117
    %v250 = vunpack.c.h.b16 %v117
    %v251 = vunpack.c.l.b16 %v118
    %v252 = vunpack.c.h.b16 %v118
    %v253 = vunpack.c.l.b16 %v119
    %v254 = vunpack.c.h.b16 %v119
    %v255 = vunpack.c.l.b16 %v120
    %v256 = vunpack.c.h.b16 %v120
    %v257 = vunpack.c.l.b16 %v121
    %v258 = vunpack.c.h.b16 %v121
    %v259 = vunpack.c.l.b16 %v122
    %v260 = vunpack.c.h.b16 %v122
    %v261 = vunpack.c.l.b16 %v123
    %v262 = vunpack.c.h.b16 %v123
    %v263 = vunpack.c.l.b16 %v124
    %v264 = vunpack.c.h.b16 %v124
    %v265 = vunpack.c.l.b16 %v125
    %v266 = vunpack.c.h.b16 %v125
    %v267 = vunpack.c.l.b16 %v126
    %v268 = vunpack.c.h.b16 %v126
    %v269 = vunpack.c.l.b16 %v127
    %v270 = vunpack.c.h.b16 %v127
    %v271 = vunpack.c.l.b16 %v128
    %v272 = vunpack.c.h.b16 %v128
    %v273 = vunpack.c.l.b16 %v129
    %v274 = vunpack.c.h.b16 %v129
    %v275 = vunpack.c.l.b16 %v130
    %v276 = vunpack.c.h.b16 %v130
    %v277 = vunpack.c.l.b16 %v131
    %v278 = vunpack.c.h.b16 %v131
    %v279 = vunpack.c.l.b16 %v132
    %v280 = vunpack.c.h.b16 %v132
    %v281 = vunpack.c.l.b16 %v133
    %v282 = vunpack.c.h.b16 %v133
    %v283 = vunpack.c.l.b16 %v134
    %v284 = vunpack.c.h.b16 %v134
    %v285 = vunpack.c.l.b16 %v135
    %v286 = vunpack.c.h.b16 %v135
    %v287 = vunpack.c.l.b16 %v136
    %v288 = vunpack.c.h.b16 %v136
    %v289 = vunpack.c.l.b16 %v137
    %v290 = vunpack.c.h.b16 %v137
    %v291 = vunpack.c.l.b16 %v138
    %v292 = vunpack.c.h.b16 %v138
    %v293 = vunpack.c.l.b16 %v139
    %v294 = vunpack.c.h.b16 %v139
    %v295 = vunpack.c.l.b16 %v140
    %v296 = vunpack.c.h.b16 %v140
    %v297 = vunpack.c.l.b16 %v141
    %v298 = vunpack.c.h.b16 %v141
    %v299 = vunpack.c.l.b16 %v142
    %v300 = vunpack.c.h.b16 %v142
    %v301 = vunpack.c.l.b16 %v143
    %v302 = vunpack.c.h.b16 %v143
    %v303 = vunpack.c.l.b16 %v144
    %v304 = vunpack.c.h.b16 %v144
    %v305 = vunpack.c.l.b16 %v145
    %v306 = vunpack.c.h.b16 %v145
    %v307 = vunpack.c.l.b16 %v146
    %v308 = vunpack.c.h.b16 %v146
    %v309 = vunpack.c.l.b16 %v147
    %v310 = vunpack.c.h.b16 %v147
    %v311 = vunpack.c.l.b16 %v148
    %v312 = vunpack.c.h.b16 %v148
    %v313 = vunpack.c.l.b16 %v149
    %v314 = vunpack.c.h.b16 %v149
    %v315 = vunpack.c.l.b16 %v150
    %v316 = vunpack.c.h.b16 %v150
    %v317 = vunpack.c.l.b16 %v151
    %v318 = vunpack.c.h.b16 %v151
    %v319 = vunpack.c.l.b16 %v152
    %v320 = vunpack.c.h.b16 %v152
    %v321 = vunpack.c.l.b16 %v153
    %v322 = vunpack.c.h.b16 %v153
    %v323 = vunpack.c.l.b16 %v154
    %v324 = vunpack.c.h.b16 %v154
    %v325 = vunpack.c.l.b16 %v155
    %v326 = vunpack.c.h.b16 %v155
    %v327 = vunpack.c.l.b16 %v156
    %v328 = vunpack.c.h.b16 %v156
    %v329 = vunpack.c.l.b16 %v157
    %v330 = vunpack.c.h.b16 %v157
    %v331 = vunpack.c.l.b16 %v158
    %v332 = vunpack.c.h.b16 %v158
    %v333 = vunpack.c.l.b16 %v159
    %v334 = vunpack.c.h.b16 %v159
    %v335 = vunpack.c.l.b16 %v160
    %v336 = vunpack.c.h.b16 %v160
    %v337 = vunpack.c.l.b16 %v161
    %v338 = vunpack.c.h.b16 %v161
    %v339 = vunpack.c.l.b16 %v162
    %v340 = vunpack.c.h.b16 %v162
    %v341 = vunpack.c.l.b16 %v163
    %v342 = vunpack.c.h.b16 %v163
    %v343 = vunpack.c.l.b16 %v164
    %v344 = vunpack.c.h.b16 %v164
    %v345 = vunpack.c.l.b16 %v165
    %v346 = vunpack.c.h.b16 %v165
    %v347 = vunpack.c.l.b16 %v166
    %v348 = vunpack.c.h.b16 %v166
    %v349 = vunpack.c.l.b16 %v167
    %v350 = vunpack.c.h.b16 %v167
    %v351 = vunpack.c.l.b16 %v168
    %v352 = vunpack.c.h.b16 %v168
    %v353 = vunpack.c.l.b16 %v169
    %v354 = vunpack.c.h.b16 %v169
    %v355 = vunpack.c.l.b16 %v170
    %v356 = vunpack.c.h.b16 %v170
    %v357 = vunpack.c.l.b16 %v171
    %v358 = vunpack.c.h.b16 %v171
    %v359 = vunpack.c.l.b16 %v172
    %v360 = vunpack.c.h.b16 %v172
    %v361 = vunpack.c.l.b16 %v173
    %v362 = vunpack.c.h.b16 %v173
    %v363 = vunpack.c.l.b16 %v174
    %v364 = vunpack.c.h.b16 %v174
    %v365 = vunpack.c.l.b16 %v175
    %v366 = vunpack.c.h.b16 %v175
    %v367 = vunpack.c.l.b16 %v176
    %v368 = vunpack.c.h.b16 %v176
    %v369 = vpack.c.b16 %v249, %v241
    %v370 = vpack.c.b16 %v250, %v242
    %v371 = vpack.c.b16 %v251, %v243
    %v372 = vpack.c.b16 %v252, %v244
    %v373 = vpack.c.b16 %v253, %v245
    %v374 = vpack.c.b16 %v254, %v246
    %v375 = vpack.c.b16 %v255, %v247
    %v376 = vpack.c.b16 %v256, %v248
    %v377 = vpack.c.b16 %v265, %v257
    %v378 = vpack.c.b16 %v266, %v258
    %v379 = vpack.c.b16 %v267, %v259
    %v380 = vpack.c.b16 %v268, %v260
    %v381 = vpack.c.b16 %v269, %v261
    %v382 = vpack.c.b16 %v270, %v262
    %v383 = vpack.c.b16 %v271, %v263
    %v384 = vpack.c.b16 %v272, %v264
    %v385 = vpack.c.b16 %v281, %v273
    %v386 = vpack.c.b16 %v282, %v274
    %v387 = vpack.c.b16 %v283, %v275
    %v388 = vpack.c.b16 %v284, %v276
    %v389 = vpack.c.b16 %v285, %v277
    %v390 = vpack.c.b16 %v286, %v278
    %v391 = vpack.c.b16 %v287, %v279
    %v392 = vpack.c.b16 %v288, %v280
    %v393 = vpack.c.b16 %v297, %v289
    %v394 = vpack.c.b16 %v298, %v290
    %v395 = vpack.c.b16 %v299, %v291
    %v396 = vpack.c.b16 %v300, %v292
    %v397 = vpack.c.b16 %v301, %v293
    %v398 = vpack.c.b16 %v302, %v294
    %v399 = vpack.c.b16 %v303, %v295
    %v400 = vpack.c.b16 %v304, %v296
    %v401 = vpack.c.b16 %v313, %v305
    %v402 = vpack.c.b16 %v314, %v306
    %v403 = vpack.c.b16 %v315, %v307
    %v404 = vpack.c.b16 %v316, %v308
    %v405 = vpack.c.b16 %v317, %v309
    %v406 = vpack.c.b16 %v318, %v310
    %v407 = vpack.c.b16 %v319, %v311
    %v408 = vpack.c.b16 %v320, %v312
    %v409 = vpack.c.b16 %v329, %v321
    %v410 = vpack.c.b16 %v330, %v322
    %v411 = vpack.c.b16 %v331, %v323
    %v412 = vpack.c.b16 %v332, %v324
    %v413 = vpack.c.b16 %v333, %v325
    %v414 = vpack.c.b16 %v334, %v326
    %v415 = vpack.c.b16 %v335, %v327
    %v416 = vpack.c.b16 %v336, %v328
    %v417 = vpack.c.b16 %v345, %v337
    %v418 = vpack.c.b16 %v346, %v338
    %v419 = vpack.c.b16 %v347, %v339
    %v420 = vpack.c.b16 %v348, %v340
    %v421 = vpack.c.b16 %v349, %v341
    %v422 = vpack.c.b16 %v350, %v342
    %v423 = vpack.c.b16 %v351, %v343
    %v424 = vpack.c.b16 %v352, %v344
    %v425 = vpack.c.b16 %v361, %v353
    %v426 = vpack.c.b16 %v362, %v354
    %v427 = vpack.c.b16 %v363, %v355
    %v428 = vpack.c.b16 %v364, %v356
    %v429 = vpack.c.b16 %v365, %v357
    %v430 = vpack.c.b16 %v366, %v358
    %v431 = vpack.c.b16 %v367, %v359
    %v432 = vpack.c.b16 %v368, %v360
    %497 = vmatprep.subr.bf16.mxu0 %v426
    %498 = vmatpush1.bf16.msra.mxu0 %v425
    %499 = vmatprep.subr.bf16.mxu0 %v418
    %500 = vmatpush1.bf16.msra.mxu0 %v417
    %501 = vmatprep.subr.bf16.mxu0 %v410
    %502 = vmatpush1.bf16.msra.mxu0 %v409
    %503 = vmatprep.subr.bf16.mxu0 %v402
    %504 = vmatpush1.bf16.msra.mxu0 %v401
    %505 = vmatprep.subr.bf16.mxu0 %v394
    %506 = vmatpush1.bf16.msra.mxu0 %v393
    %507 = vmatprep.subr.bf16.mxu0 %v386
    %508 = vmatpush1.bf16.msra.mxu0 %v385
    %509 = vmatprep.subr.bf16.mxu0 %v378
    %510 = vmatpush1.bf16.msra.mxu0 %v377
    %511 = vmatprep.subr.bf16.mxu0 %v370
    %512 = vmatpush1.bf16.msra.mxu0 %v369
    %513 = vmatprep.subr.bf16.mxu0 0
    %514 = vmatpush2.bf16.msra.mxu0 0
    %515 = vmatprep.subr.bf16.mxu0 0
    %516 = vmatpush2.bf16.msra.mxu0 0
    %517 = vmatprep.subr.bf16.mxu0 0
    %518 = vmatpush2.bf16.msra.mxu0 0
    %519 = vmatprep.subr.bf16.mxu0 0
    %520 = vmatpush2.bf16.msra.mxu0 0
    %521 = vmatprep.subr.bf16.mxu0 0
    %522 = vmatpush2.bf16.msra.mxu0 0
    %523 = vmatprep.subr.bf16.mxu0 0
    %524 = vmatpush2.bf16.msra.mxu0 0
    %525 = vmatprep.subr.bf16.mxu0 0
    %526 = vmatpush2.bf16.msra.mxu0 0
    %527 = vmatprep.subr.bf16.mxu0 0
    %528 = vmatpush2.bf16.msra.mxu0 0
    %529 = vmatprep.mubr.bf16.mxu0 0
    %530 = vmatmul.mubr.bf16.gmra.mxu0 %v100
    %v531 = vpop.f32.mrf.mxu0
    %v532 = vadd.f32 0.0, %v531
    %v533 = vpop.f32.mrf.mxu0
    %v534 = vadd.f32 0.0, %v533
    %v535 = vpop.f32.mrf.mxu0
    %v536 = vadd.f32 0.0, %v535
    %v537 = vpop.f32.mrf.mxu0
    %v538 = vadd.f32 0.0, %v537
    %539 = vmatprep.mubr.bf16.mxu0 0
    %540 = vmatmul.mubr.bf16.gmra.mxu0 %v101
    %v541 = vpop.f32.mrf.mxu0
    %v542 = vadd.f32 0.0, %v541
    %v543 = vpop.f32.mrf.mxu0
    %v544 = vadd.f32 0.0, %v543
    %v545 = vpop.f32.mrf.mxu0
    %v546 = vadd.f32 0.0, %v545
    %v547 = vpop.f32.mrf.mxu0
    %v548 = vadd.f32 0.0, %v547
    %549 = vmatprep.mubr.bf16.mxu0 0
    %550 = vmatmul.mubr.bf16.gmra.mxu0 %v102
    %v551 = vpop.f32.mrf.mxu0
    %v552 = vadd.f32 0.0, %v551
    %v553 = vpop.f32.mrf.mxu0
    %v554 = vadd.f32 0.0, %v553
    %v555 = vpop.f32.mrf.mxu0
    %v556 = vadd.f32 0.0, %v555
    %v557 = vpop.f32.mrf.mxu0
    %v558 = vadd.f32 0.0, %v557
    %559 = vmatprep.mubr.bf16.mxu0 0
    %560 = vmatmul.mubr.bf16.gmra.mxu0 %v103
    %v561 = vpop.f32.mrf.mxu0
    %v562 = vadd.f32 0.0, %v561
    %v563 = vpop.f32.mrf.mxu0
    %v564 = vadd.f32 0.0, %v563
    %v565 = vpop.f32.mrf.mxu0
    %v566 = vadd.f32 0.0, %v565
    %v567 = vpop.f32.mrf.mxu0
    %v568 = vadd.f32 0.0, %v567
    %569 = vmatprep.mubr.bf16.mxu0 0
    %570 = vmatmul.mubr.bf16.gmra.mxu0 %v104
    %v571 = vpop.f32.mrf.mxu0
    %v572 = vadd.f32 0.0, %v571
    %v573 = vpop.f32.mrf.mxu0
    %v574 = vadd.f32 0.0, %v573
    %v575 = vpop.f32.mrf.mxu0
    %v576 = vadd.f32 0.0, %v575
    %v577 = vpop.f32.mrf.mxu0
    %v578 = vadd.f32 0.0, %v577
    %579 = vmatprep.mubr.bf16.mxu0 0
    %580 = vmatmul.mubr.bf16.gmra.mxu0 %v105
    %v581 = vpop.f32.mrf.mxu0
    %v582 = vadd.f32 0.0, %v581
    %v583 = vpop.f32.mrf.mxu0
    %v584 = vadd.f32 0.0, %v583
    %v585 = vpop.f32.mrf.mxu0
    %v586 = vadd.f32 0.0, %v585
    %v587 = vpop.f32.mrf.mxu0
    %v588 = vadd.f32 0.0, %v587
    %589 = vmatprep.mubr.bf16.mxu0 0
    %590 = vmatmul.mubr.bf16.gmra.mxu0 %v106
    %v591 = vpop.f32.mrf.mxu0
    %v592 = vadd.f32 0.0, %v591
    %v593 = vpop.f32.mrf.mxu0
    %v594 = vadd.f32 0.0, %v593
    %v595 = vpop.f32.mrf.mxu0
    %v596 = vadd.f32 0.0, %v595
    %v597 = vpop.f32.mrf.mxu0
    %v598 = vadd.f32 0.0, %v597
    %599 = vmatprep.mubr.bf16.mxu0 0
    %600 = vmatmul.mubr.bf16.gmra.mxu0 %v107
    %v601 = vpop.f32.mrf.mxu0
    %v602 = vadd.f32 0.0, %v601
    %v603 = vpop.f32.mrf.mxu0
    %v604 = vadd.f32 0.0, %v603
    %v605 = vpop.f32.mrf.mxu0
    %v606 = vadd.f32 0.0, %v605
    %v607 = vpop.f32.mrf.mxu0
    %v608 = vadd.f32 0.0, %v607
    %609 = vmatprep.mubr.bf16.mxu0 0
    %610 = vmatmul.mubr.bf16.gmra.mxu0 %v108
    %v611 = vpop.f32.mrf.mxu0
    %v612 = vadd.f32 0.0, %v611
    %v613 = vpop.f32.mrf.mxu0
    %v614 = vadd.f32 0.0, %v613
    %v615 = vpop.f32.mrf.mxu0
    %v616 = vadd.f32 0.0, %v615
    %v617 = vpop.f32.mrf.mxu0
    %v618 = vadd.f32 0.0, %v617
    %619 = vmatprep.mubr.bf16.mxu0 0
    %620 = vmatmul.mubr.bf16.gmra.mxu0 %v109
    %v621 = vpop.f32.mrf.mxu0
    %v622 = vadd.f32 0.0, %v621
    %v623 = vpop.f32.mrf.mxu0
    %v624 = vadd.f32 0.0, %v623
    %v625 = vpop.f32.mrf.mxu0
    %v626 = vadd.f32 0.0, %v625
    %v627 = vpop.f32.mrf.mxu0
    %v628 = vadd.f32 0.0, %v627
    %629 = vmatprep.mubr.bf16.mxu0 0
    %630 = vmatmul.mubr.bf16.gmra.mxu0 %v110
    %v631 = vpop.f32.mrf.mxu0
    %v632 = vadd.f32 0.0, %v631
    %v633 = vpop.f32.mrf.mxu0
    %v634 = vadd.f32 0.0, %v633
    %v635 = vpop.f32.mrf.mxu0
    %v636 = vadd.f32 0.0, %v635
    %v637 = vpop.f32.mrf.mxu0
    %v638 = vadd.f32 0.0, %v637
    %639 = vmatprep.mubr.bf16.mxu0 0
    %640 = vmatmul.mubr.bf16.gmra.mxu0 %v111
    %v641 = vpop.f32.mrf.mxu0
    %v642 = vadd.f32 0.0, %v641
    %v643 = vpop.f32.mrf.mxu0
    %v644 = vadd.f32 0.0, %v643
    %v645 = vpop.f32.mrf.mxu0
    %v646 = vadd.f32 0.0, %v645
    %v647 = vpop.f32.mrf.mxu0
    %v648 = vadd.f32 0.0, %v647
    %649 = vmatprep.mubr.bf16.mxu0 0
    %650 = vmatmul.mubr.bf16.gmra.mxu0 %v112
    %v651 = vpop.f32.mrf.mxu0
    %v652 = vadd.f32 0.0, %v651
    %v653 = vpop.f32.mrf.mxu0
    %v654 = vadd.f32 0.0, %v653
    %v655 = vpop.f32.mrf.mxu0
    %v656 = vpop.f32.mrf.mxu0
    %657 = vdwg.mxu0
    %658 = vmatprep.subr.bf16.mxu0 %v428
    %659 = vmatpush1.bf16.msra.mxu0 %v427
    %660 = vmatprep.subr.bf16.mxu0 %v420
    %661 = vmatpush1.bf16.msra.mxu0 %v419
    %662 = vmatprep.subr.bf16.mxu0 %v412
    %663 = vmatpush1.bf16.msra.mxu0 %v411
    %664 = vmatprep.subr.bf16.mxu0 %v404
    %665 = vmatpush1.bf16.msra.mxu0 %v403
    %666 = vmatprep.subr.bf16.mxu0 %v396
    %667 = vmatpush1.bf16.msra.mxu0 %v395
    %668 = vmatprep.subr.bf16.mxu0 %v388
    %669 = vmatpush1.bf16.msra.mxu0 %v387
    %670 = vmatprep.subr.bf16.mxu0 %v380
    %671 = vmatpush1.bf16.msra.mxu0 %v379
    %672 = vmatprep.subr.bf16.mxu0 %v372
    %673 = vmatpush1.bf16.msra.mxu0 %v371
    %674 = vmatprep.subr.bf16.mxu0 0
    %675 = vmatpush2.bf16.msra.mxu0 0
    %676 = vmatprep.subr.bf16.mxu0 0
    %677 = vmatpush2.bf16.msra.mxu0 0
    %678 = vmatprep.subr.bf16.mxu0 0
    %679 = vmatpush2.bf16.msra.mxu0 0
    %680 = vmatprep.subr.bf16.mxu0 0
    %681 = vmatpush2.bf16.msra.mxu0 0
    %682 = vmatprep.subr.bf16.mxu0 0
    %683 = vmatpush2.bf16.msra.mxu0 0
    %684 = vmatprep.subr.bf16.mxu0 0
    %685 = vmatpush2.bf16.msra.mxu0 0
    %686 = vmatprep.subr.bf16.mxu0 0
    %687 = vmatpush2.bf16.msra.mxu0 0
    %688 = vmatprep.subr.bf16.mxu0 0
    %689 = vmatpush2.bf16.msra.mxu0 0
    %690 = vmatprep.mubr.bf16.mxu0 0
    %691 = vmatmul.mubr.bf16.gmra.mxu0 %v100
    %v692 = vpop.f32.mrf.mxu0
    %v693 = vadd.f32 0.0, %v692
    %v694 = vpop.f32.mrf.mxu0
    %v695 = vadd.f32 0.0, %v694
    %v696 = vpop.f32.mrf.mxu0
    %v697 = vadd.f32 0.0, %v696
    %v698 = vpop.f32.mrf.mxu0
    %v699 = vadd.f32 0.0, %v698
    %700 = vmatprep.mubr.bf16.mxu0 0
    %701 = vmatmul.mubr.bf16.gmra.mxu0 %v101
    %v702 = vpop.f32.mrf.mxu0
    %v703 = vadd.f32 0.0, %v702
    %v704 = vpop.f32.mrf.mxu0
    %v705 = vadd.f32 0.0, %v704
    %v706 = vpop.f32.mrf.mxu0
    %v707 = vadd.f32 0.0, %v706
    %v708 = vpop.f32.mrf.mxu0
    %v709 = vadd.f32 0.0, %v708
    %710 = vmatprep.mubr.bf16.mxu0 0
    %711 = vmatmul.mubr.bf16.gmra.mxu0 %v102
    %v712 = vpop.f32.mrf.mxu0
    %v713 = vadd.f32 0.0, %v712
    %v714 = vpop.f32.mrf.mxu0
    %v715 = vadd.f32 0.0, %v714
    %v716 = vpop.f32.mrf.mxu0
    %v717 = vadd.f32 0.0, %v716
    %v718 = vpop.f32.mrf.mxu0
    %v719 = vadd.f32 0.0, %v718
    %720 = vmatprep.mubr.bf16.mxu0 0
    %721 = vmatmul.mubr.bf16.gmra.mxu0 %v103
    %v722 = vpop.f32.mrf.mxu0
    %v723 = vadd.f32 0.0, %v722
    %v724 = vpop.f32.mrf.mxu0
    %v725 = vadd.f32 0.0, %v724
    %v726 = vpop.f32.mrf.mxu0
    %v727 = vadd.f32 0.0, %v726
    %v728 = vpop.f32.mrf.mxu0
    %v729 = vadd.f32 0.0, %v728
    %730 = vmatprep.mubr.bf16.mxu0 0
    %731 = vmatmul.mubr.bf16.gmra.mxu0 %v104
    %v732 = vpop.f32.mrf.mxu0
    %v733 = vadd.f32 0.0, %v732
    %v734 = vpop.f32.mrf.mxu0
    %v735 = vadd.f32 0.0, %v734
    %v736 = vpop.f32.mrf.mxu0
    %v737 = vadd.f32 0.0, %v736
    %v738 = vpop.f32.mrf.mxu0
    %v739 = vadd.f32 0.0, %v738
    %740 = vmatprep.mubr.bf16.mxu0 0
    %741 = vmatmul.mubr.bf16.gmra.mxu0 %v105
    %v742 = vpop.f32.mrf.mxu0
    %v743 = vadd.f32 0.0, %v742
    %v744 = vpop.f32.mrf.mxu0
    %v745 = vadd.f32 0.0, %v744
    %v746 = vpop.f32.mrf.mxu0
    %v747 = vadd.f32 0.0, %v746
    %v748 = vpop.f32.mrf.mxu0
    %v749 = vadd.f32 0.0, %v748
    %750 = vmatprep.mubr.bf16.mxu0 0
    %751 = vmatmul.mubr.bf16.gmra.mxu0 %v106
    %v752 = vpop.f32.mrf.mxu0
    %v753 = vadd.f32 0.0, %v752
    %v754 = vpop.f32.mrf.mxu0
    %v755 = vadd.f32 0.0, %v754
    %v756 = vpop.f32.mrf.mxu0
    %v757 = vadd.f32 0.0, %v756
    %v758 = vpop.f32.mrf.mxu0
    %v759 = vadd.f32 0.0, %v758
    %760 = vmatprep.mubr.bf16.mxu0 0
    %761 = vmatmul.mubr.bf16.gmra.mxu0 %v107
    %v762 = vpop.f32.mrf.mxu0
    %v763 = vadd.f32 0.0, %v762
    %v764 = vpop.f32.mrf.mxu0
    %v765 = vadd.f32 0.0, %v764
    %v766 = vpop.f32.mrf.mxu0
    %v767 = vadd.f32 0.0, %v766
    %v768 = vpop.f32.mrf.mxu0
    %v769 = vadd.f32 0.0, %v768
    %770 = vmatprep.mubr.bf16.mxu0 0
    %771 = vmatmul.mubr.bf16.gmra.mxu0 %v108
    %v772 = vpop.f32.mrf.mxu0
    %v773 = vadd.f32 0.0, %v772
    %v774 = vpop.f32.mrf.mxu0
    %v775 = vadd.f32 0.0, %v774
    %v776 = vpop.f32.mrf.mxu0
    %v777 = vadd.f32 0.0, %v776
    %v778 = vpop.f32.mrf.mxu0
    %v779 = vadd.f32 0.0, %v778
    %780 = vmatprep.mubr.bf16.mxu0 0
    %781 = vmatmul.mubr.bf16.gmra.mxu0 %v109
    %v782 = vpop.f32.mrf.mxu0
    %v783 = vadd.f32 0.0, %v782
    %v784 = vpop.f32.mrf.mxu0
    %v785 = vadd.f32 0.0, %v784
    %v786 = vpop.f32.mrf.mxu0
    %v787 = vadd.f32 0.0, %v786
    %v788 = vpop.f32.mrf.mxu0
    %v789 = vadd.f32 0.0, %v788
    %790 = vmatprep.mubr.bf16.mxu0 0
    %791 = vmatmul.mubr.bf16.gmra.mxu0 %v110
    %v792 = vpop.f32.mrf.mxu0
    %v793 = vadd.f32 0.0, %v792
    %v794 = vpop.f32.mrf.mxu0
    %v795 = vadd.f32 0.0, %v794
    %v796 = vpop.f32.mrf.mxu0
    %v797 = vadd.f32 0.0, %v796
    %v798 = vpop.f32.mrf.mxu0
    %v799 = vadd.f32 0.0, %v798
    %800 = vmatprep.mubr.bf16.mxu0 0
    %801 = vmatmul.mubr.bf16.gmra.mxu0 %v111
    %v802 = vpop.f32.mrf.mxu0
    %v803 = vadd.f32 0.0, %v802
    %v804 = vpop.f32.mrf.mxu0
    %v805 = vadd.f32 0.0, %v804
    %v806 = vpop.f32.mrf.mxu0
    %v807 = vadd.f32 0.0, %v806
    %v808 = vpop.f32.mrf.mxu0
    %v809 = vadd.f32 0.0, %v808
    %810 = vmatprep.mubr.bf16.mxu0 0
    %811 = vmatmul.mubr.bf16.gmra.mxu0 %v112
    %v812 = vpop.f32.mrf.mxu0
    %v813 = vadd.f32 0.0, %v812
    %v814 = vpop.f32.mrf.mxu0
    %v815 = vadd.f32 0.0, %v814
    %v816 = vpop.f32.mrf.mxu0
    %v817 = vpop.f32.mrf.mxu0
    %818 = vdwg.mxu0
    %819 = vmatprep.subr.bf16.mxu0 %v430
    %820 = vmatpush1.bf16.msra.mxu0 %v429
    %821 = vmatprep.subr.bf16.mxu0 %v422
    %822 = vmatpush1.bf16.msra.mxu0 %v421
    %823 = vmatprep.subr.bf16.mxu0 %v414
    %824 = vmatpush1.bf16.msra.mxu0 %v413
    %825 = vmatprep.subr.bf16.mxu0 %v406
    %826 = vmatpush1.bf16.msra.mxu0 %v405
    %827 = vmatprep.subr.bf16.mxu0 %v398
    %828 = vmatpush1.bf16.msra.mxu0 %v397
    %829 = vmatprep.subr.bf16.mxu0 %v390
    %830 = vmatpush1.bf16.msra.mxu0 %v389
    %831 = vmatprep.subr.bf16.mxu0 %v382
    %832 = vmatpush1.bf16.msra.mxu0 %v381
    %833 = vmatprep.subr.bf16.mxu0 %v374
    %834 = vmatpush1.bf16.msra.mxu0 %v373
    %835 = vmatprep.subr.bf16.mxu0 0
    %836 = vmatpush2.bf16.msra.mxu0 0
    %837 = vmatprep.subr.bf16.mxu0 0
    %838 = vmatpush2.bf16.msra.mxu0 0
    %839 = vmatprep.subr.bf16.mxu0 0
    %840 = vmatpush2.bf16.msra.mxu0 0
    %841 = vmatprep.subr.bf16.mxu0 0
    %842 = vmatpush2.bf16.msra.mxu0 0
    %843 = vmatprep.subr.bf16.mxu0 0
    %844 = vmatpush2.bf16.msra.mxu0 0
    %845 = vmatprep.subr.bf16.mxu0 0
    %846 = vmatpush2.bf16.msra.mxu0 0
    %847 = vmatprep.subr.bf16.mxu0 0
    %848 = vmatpush2.bf16.msra.mxu0 0
    %849 = vmatprep.subr.bf16.mxu0 0
    %850 = vmatpush2.bf16.msra.mxu0 0
    %851 = vmatprep.mubr.bf16.mxu0 0
    %852 = vmatmul.mubr.bf16.gmra.mxu0 %v100
    %v853 = vpop.f32.mrf.mxu0
    %v854 = vadd.f32 0.0, %v853
    %v855 = vpop.f32.mrf.mxu0
    %v856 = vadd.f32 0.0, %v855
    %v857 = vpop.f32.mrf.mxu0
    %v858 = vadd.f32 0.0, %v857
    %v859 = vpop.f32.mrf.mxu0
    %v860 = vadd.f32 0.0, %v859
    %861 = vmatprep.mubr.bf16.mxu0 0
    %862 = vmatmul.mubr.bf16.gmra.mxu0 %v101
    %v863 = vpop.f32.mrf.mxu0
    %v864 = vadd.f32 0.0, %v863
    %v865 = vpop.f32.mrf.mxu0
    %v866 = vadd.f32 0.0, %v865
    %v867 = vpop.f32.mrf.mxu0
    %v868 = vadd.f32 0.0, %v867
    %v869 = vpop.f32.mrf.mxu0
    %v870 = vadd.f32 0.0, %v869
    %871 = vmatprep.mubr.bf16.mxu0 0
    %872 = vmatmul.mubr.bf16.gmra.mxu0 %v102
    %v873 = vpop.f32.mrf.mxu0
    %v874 = vadd.f32 0.0, %v873
    %v875 = vpop.f32.mrf.mxu0
    %v876 = vadd.f32 0.0, %v875
    %v877 = vpop.f32.mrf.mxu0
    %v878 = vadd.f32 0.0, %v877
    %v879 = vpop.f32.mrf.mxu0
    %v880 = vadd.f32 0.0, %v879
    %881 = vmatprep.mubr.bf16.mxu0 0
    %882 = vmatmul.mubr.bf16.gmra.mxu0 %v103
    %v883 = vpop.f32.mrf.mxu0
    %v884 = vadd.f32 0.0, %v883
    %v885 = vpop.f32.mrf.mxu0
    %v886 = vadd.f32 0.0, %v885
    %v887 = vpop.f32.mrf.mxu0
    %v888 = vadd.f32 0.0, %v887
    %v889 = vpop.f32.mrf.mxu0
    %v890 = vadd.f32 0.0, %v889
    %891 = vmatprep.mubr.bf16.mxu0 0
    %892 = vmatmul.mubr.bf16.gmra.mxu0 %v104
    %v893 = vpop.f32.mrf.mxu0
    %v894 = vadd.f32 0.0, %v893
    %v895 = vpop.f32.mrf.mxu0
    %v896 = vadd.f32 0.0, %v895
    %v897 = vpop.f32.mrf.mxu0
    %v898 = vadd.f32 0.0, %v897
    %v899 = vpop.f32.mrf.mxu0
    %v900 = vadd.f32 0.0, %v899
    %901 = vmatprep.mubr.bf16.mxu0 0
    %902 = vmatmul.mubr.bf16.gmra.mxu0 %v105
    %v903 = vpop.f32.mrf.mxu0
    %v904 = vadd.f32 0.0, %v903
    %v905 = vpop.f32.mrf.mxu0
    %v906 = vadd.f32 0.0, %v905
    %v907 = vpop.f32.mrf.mxu0
    %v908 = vadd.f32 0.0, %v907
    %v909 = vpop.f32.mrf.mxu0
    %v910 = vadd.f32 0.0, %v909
    %911 = vmatprep.mubr.bf16.mxu0 0
    %912 = vmatmul.mubr.bf16.gmra.mxu0 %v106
    %v913 = vpop.f32.mrf.mxu0
    %v914 = vadd.f32 0.0, %v913
    %v915 = vpop.f32.mrf.mxu0
    %v916 = vadd.f32 0.0, %v915
    %v917 = vpop.f32.mrf.mxu0
    %v918 = vadd.f32 0.0, %v917
    %v919 = vpop.f32.mrf.mxu0
    %v920 = vadd.f32 0.0, %v919
    %921 = vmatprep.mubr.bf16.mxu0 0
    %922 = vmatmul.mubr.bf16.gmra.mxu0 %v107
    %v923 = vpop.f32.mrf.mxu0
    %v924 = vadd.f32 0.0, %v923
    %v925 = vpop.f32.mrf.mxu0
    %v926 = vadd.f32 0.0, %v925
    %v927 = vpop.f32.mrf.mxu0
    %v928 = vadd.f32 0.0, %v927
    %v929 = vpop.f32.mrf.mxu0
    %v930 = vadd.f32 0.0, %v929
    %931 = vmatprep.mubr.bf16.mxu0 0
    %932 = vmatmul.mubr.bf16.gmra.mxu0 %v108
    %v933 = vpop.f32.mrf.mxu0
    %v934 = vadd.f32 0.0, %v933
    %v935 = vpop.f32.mrf.mxu0
    %v936 = vadd.f32 0.0, %v935
    %v937 = vpop.f32.mrf.mxu0
    %v938 = vadd.f32 0.0, %v937
    %v939 = vpop.f32.mrf.mxu0
    %v940 = vadd.f32 0.0, %v939
    %941 = vmatprep.mubr.bf16.mxu0 0
    %942 = vmatmul.mubr.bf16.gmra.mxu0 %v109
    %v943 = vpop.f32.mrf.mxu0
    %v944 = vadd.f32 0.0, %v943
    %v945 = vpop.f32.mrf.mxu0
    %v946 = vadd.f32 0.0, %v945
    %v947 = vpop.f32.mrf.mxu0
    %v948 = vadd.f32 0.0, %v947
    %v949 = vpop.f32.mrf.mxu0
    %v950 = vadd.f32 0.0, %v949
    %951 = vmatprep.mubr.bf16.mxu0 0
    %952 = vmatmul.mubr.bf16.gmra.mxu0 %v110
    %v953 = vpop.f32.mrf.mxu0
    %v954 = vadd.f32 0.0, %v953
    %v955 = vpop.f32.mrf.mxu0
    %v956 = vadd.f32 0.0, %v955
    %v957 = vpop.f32.mrf.mxu0
    %v958 = vadd.f32 0.0, %v957
    %v959 = vpop.f32.mrf.mxu0
    %v960 = vadd.f32 0.0, %v959
    %961 = vmatprep.mubr.bf16.mxu0 0
    %962 = vmatmul.mubr.bf16.gmra.mxu0 %v111
    %v963 = vpop.f32.mrf.mxu0
    %v964 = vadd.f32 0.0, %v963
    %v965 = vpop.f32.mrf.mxu0
    %v966 = vadd.f32 0.0, %v965
    %v967 = vpop.f32.mrf.mxu0
    %v968 = vadd.f32 0.0, %v967
    %v969 = vpop.f32.mrf.mxu0
    %v970 = vadd.f32 0.0, %v969
    %971 = vmatprep.mubr.bf16.mxu0 0
    %972 = vmatmul.mubr.bf16.gmra.mxu0 %v112
    %v973 = vpop.f32.mrf.mxu0
    %v974 = vadd.f32 0.0, %v973
    %v975 = vpop.f32.mrf.mxu0
    %v976 = vadd.f32 0.0, %v975
    %v977 = vpop.f32.mrf.mxu0
    %v978 = vpop.f32.mrf.mxu0
    %979 = vdwg.mxu0
    %980 = vmatprep.subr.bf16.mxu0 %v432
    %981 = vmatpush1.bf16.msra.mxu0 %v431
    %982 = vmatprep.subr.bf16.mxu0 %v424
    %983 = vmatpush1.bf16.msra.mxu0 %v423
    %984 = vmatprep.subr.bf16.mxu0 %v416
    %985 = vmatpush1.bf16.msra.mxu0 %v415
    %986 = vmatprep.subr.bf16.mxu0 %v408
    %987 = vmatpush1.bf16.msra.mxu0 %v407
    %988 = vmatprep.subr.bf16.mxu0 %v400
    %989 = vmatpush1.bf16.msra.mxu0 %v399
    %990 = vmatprep.subr.bf16.mxu0 %v392
    %991 = vmatpush1.bf16.msra.mxu0 %v391
    %992 = vmatprep.subr.bf16.mxu0 %v384
    %993 = vmatpush1.bf16.msra.mxu0 %v383
    %994 = vmatprep.subr.bf16.mxu0 %v376
    %995 = vmatpush1.bf16.msra.mxu0 %v375
    %996 = vmatprep.subr.bf16.mxu0 0
    %997 = vmatpush2.bf16.msra.mxu0 0
    %998 = vmatprep.subr.bf16.mxu0 0
    %999 = vmatpush2.bf16.msra.mxu0 0
    %1000 = vmatprep.subr.bf16.mxu0 0
    %1001 = vmatpush2.bf16.msra.mxu0 0
    %1002 = vmatprep.subr.bf16.mxu0 0
    %1003 = vmatpush2.bf16.msra.mxu0 0
    %1004 = vmatprep.subr.bf16.mxu0 0
    %1005 = vmatpush2.bf16.msra.mxu0 0
    %1006 = vmatprep.subr.bf16.mxu0 0
    %1007 = vmatpush2.bf16.msra.mxu0 0
    %1008 = vmatprep.subr.bf16.mxu0 0
    %1009 = vmatpush2.bf16.msra.mxu0 0
    %1010 = vmatprep.subr.bf16.mxu0 0
    %1011 = vmatpush2.bf16.msra.mxu0 0
    %1012 = vmatprep.mubr.bf16.mxu0 0
    %1013 = vmatmul.mubr.bf16.gmra.mxu0 %v100
    %v1014 = vpop.f32.mrf.mxu0
    %v1015 = vadd.f32 0.0, %v1014
    %v1016 = vpop.f32.mrf.mxu0
    %v1017 = vadd.f32 0.0, %v1016
    %v1018 = vpop.f32.mrf.mxu0
    %v1019 = vadd.f32 0.0, %v1018
    %v1020 = vpop.f32.mrf.mxu0
    %v1021 = vadd.f32 0.0, %v1020
    %1022 = vmatprep.mubr.bf16.mxu0 0
    %1023 = vmatmul.mubr.bf16.gmra.mxu0 %v101
    %v1024 = vpop.f32.mrf.mxu0
    %v1025 = vadd.f32 0.0, %v1024
    %v1026 = vpop.f32.mrf.mxu0
    %v1027 = vadd.f32 0.0, %v1026
    %v1028 = vpop.f32.mrf.mxu0
    %v1029 = vadd.f32 0.0, %v1028
    %v1030 = vpop.f32.mrf.mxu0
    %v1031 = vadd.f32 0.0, %v1030
    %1032 = vmatprep.mubr.bf16.mxu0 0
    %1033 = vmatmul.mubr.bf16.gmra.mxu0 %v102
    %v1034 = vpop.f32.mrf.mxu0
    %v1035 = vadd.f32 0.0, %v1034
    %v1036 = vpop.f32.mrf.mxu0
    %v1037 = vadd.f32 0.0, %v1036
    %v1038 = vpop.f32.mrf.mxu0
    %v1039 = vadd.f32 0.0, %v1038
    %v1040 = vpop.f32.mrf.mxu0
    %v1041 = vadd.f32 0.0, %v1040
    %1042 = vmatprep.mubr.bf16.mxu0 0
    %1043 = vmatmul.mubr.bf16.gmra.mxu0 %v103
    %v1044 = vpop.f32.mrf.mxu0
    %v1045 = vadd.f32 0.0, %v1044
    %v1046 = vpop.f32.mrf.mxu0
    %v1047 = vadd.f32 0.0, %v1046
    %v1048 = vpop.f32.mrf.mxu0
    %v1049 = vadd.f32 0.0, %v1048
    %v1050 = vpop.f32.mrf.mxu0
    %v1051 = vadd.f32 0.0, %v1050
    %1052 = vmatprep.mubr.bf16.mxu0 0
    %1053 = vmatmul.mubr.bf16.gmra.mxu0 %v104
    %v1054 = vpop.f32.mrf.mxu0
    %v1055 = vadd.f32 0.0, %v1054
    %v1056 = vpop.f32.mrf.mxu0
    %v1057 = vadd.f32 0.0, %v1056
    %v1058 = vpop.f32.mrf.mxu0
    %v1059 = vadd.f32 0.0, %v1058
    %v1060 = vpop.f32.mrf.mxu0
    %v1061 = vadd.f32 0.0, %v1060
    %1062 = vmatprep.mubr.bf16.mxu0 0
    %1063 = vmatmul.mubr.bf16.gmra.mxu0 %v105
    %v1064 = vpop.f32.mrf.mxu0
    %v1065 = vadd.f32 0.0, %v1064
    %v1066 = vpop.f32.mrf.mxu0
    %v1067 = vadd.f32 0.0, %v1066
    %v1068 = vpop.f32.mrf.mxu0
    %v1069 = vadd.f32 0.0, %v1068
    %v1070 = vpop.f32.mrf.mxu0
    %v1071 = vadd.f32 0.0, %v1070
    %1072 = vmatprep.mubr.bf16.mxu0 0
    %1073 = vmatmul.mubr.bf16.gmra.mxu0 %v106
    %v1074 = vpop.f32.mrf.mxu0
    %v1075 = vadd.f32 0.0, %v1074
    %v1076 = vpop.f32.mrf.mxu0
    %v1077 = vadd.f32 0.0, %v1076
    %v1078 = vpop.f32.mrf.mxu0
    %v1079 = vadd.f32 0.0, %v1078
    %v1080 = vpop.f32.mrf.mxu0
    %v1081 = vadd.f32 0.0, %v1080
    %1082 = vmatprep.mubr.bf16.mxu0 0
    %1083 = vmatmul.mubr.bf16.gmra.mxu0 %v107
    %v1084 = vpop.f32.mrf.mxu0
    %v1085 = vadd.f32 0.0, %v1084
    %v1086 = vpop.f32.mrf.mxu0
    %v1087 = vadd.f32 0.0, %v1086
    %v1088 = vpop.f32.mrf.mxu0
    %v1089 = vadd.f32 0.0, %v1088
    %v1090 = vpop.f32.mrf.mxu0
    %v1091 = vadd.f32 0.0, %v1090
    %1092 = vmatprep.mubr.bf16.mxu0 0
    %1093 = vmatmul.mubr.bf16.gmra.mxu0 %v108
    %v1094 = vpop.f32.mrf.mxu0
    %v1095 = vadd.f32 0.0, %v1094
    %v1096 = vpop.f32.mrf.mxu0
    %v1097 = vadd.f32 0.0, %v1096
    %v1098 = vpop.f32.mrf.mxu0
    %v1099 = vadd.f32 0.0, %v1098
    %v1100 = vpop.f32.mrf.mxu0
    %v1101 = vadd.f32 0.0, %v1100
    %1102 = vmatprep.mubr.bf16.mxu0 0
    %1103 = vmatmul.mubr.bf16.gmra.mxu0 %v109
    %v1104 = vpop.f32.mrf.mxu0
    %v1105 = vadd.f32 0.0, %v1104
    %v1106 = vpop.f32.mrf.mxu0
    %v1107 = vadd.f32 0.0, %v1106
    %v1108 = vpop.f32.mrf.mxu0
    %v1109 = vadd.f32 0.0, %v1108
    %v1110 = vpop.f32.mrf.mxu0
    %v1111 = vadd.f32 0.0, %v1110
    %1112 = vmatprep.mubr.bf16.mxu0 0
    %1113 = vmatmul.mubr.bf16.gmra.mxu0 %v110
    %v1114 = vpop.f32.mrf.mxu0
    %v1115 = vadd.f32 0.0, %v1114
    %v1116 = vpop.f32.mrf.mxu0
    %v1117 = vadd.f32 0.0, %v1116
    %v1118 = vpop.f32.mrf.mxu0
    %v1119 = vadd.f32 0.0, %v1118
    %v1120 = vpop.f32.mrf.mxu0
    %v1121 = vadd.f32 0.0, %v1120
    %1122 = vmatprep.mubr.bf16.mxu0 0
    %1123 = vmatmul.mubr.bf16.gmra.mxu0 %v111
    %v1124 = vpop.f32.mrf.mxu0
    %v1125 = vadd.f32 0.0, %v1124
    %v1126 = vpop.f32.mrf.mxu0
    %v1127 = vadd.f32 0.0, %v1126
    %v1128 = vpop.f32.mrf.mxu0
    %v1129 = vadd.f32 0.0, %v1128
    %v1130 = vpop.f32.mrf.mxu0
    %v1131 = vadd.f32 0.0, %v1130
    %1132 = vmatprep.mubr.bf16.mxu0 0
    %1133 = vmatmul.mubr.bf16.gmra.mxu0 %v112
    %v1134 = vpop.f32.mrf.mxu0
    %v1135 = vadd.f32 0.0, %v1134
    %v1136 = vpop.f32.mrf.mxu0
    %v1137 = vadd.f32 0.0, %v1136
    %v1138 = vpop.f32.mrf.mxu0
    %v1139 = vpop.f32.mrf.mxu0
    %1140 = vdwg.mxu0
    %v1141 = vpack.c.bf16 %v536, %v532
    %v1142 = vpack.c.bf16 %v538, %v534
    %v1143 = vpack.c.bf16 %v697, %v693
    %v1144 = vpack.c.bf16 %v699, %v695
    %v1145 = vpack.c.bf16 %v858, %v854
    %v1146 = vpack.c.bf16 %v860, %v856
    %v1147 = vpack.c.bf16 %v1019, %v1015
    %v1148 = vpack.c.bf16 %v1021, %v1017
    %v1149 = vpack.c.bf16 %v546, %v542
    %v1150 = vpack.c.bf16 %v548, %v544
    %v1151 = vpack.c.bf16 %v707, %v703
    %v1152 = vpack.c.bf16 %v709, %v705
    %v1153 = vpack.c.bf16 %v868, %v864
    %v1154 = vpack.c.bf16 %v870, %v866
    %v1155 = vpack.c.bf16 %v1029, %v1025
    %v1156 = vpack.c.bf16 %v1031, %v1027
    %v1157 = vpack.c.bf16 %v556, %v552
    %v1158 = vpack.c.bf16 %v558, %v554
    %v1159 = vpack.c.bf16 %v717, %v713
    %v1160 = vpack.c.bf16 %v719, %v715
    %v1161 = vpack.c.bf16 %v878, %v874
    %v1162 = vpack.c.bf16 %v880, %v876
    %v1163 = vpack.c.bf16 %v1039, %v1035
    %v1164 = vpack.c.bf16 %v1041, %v1037
    %v1165 = vpack.c.bf16 %v566, %v562
    %v1166 = vpack.c.bf16 %v568, %v564
    %v1167 = vpack.c.bf16 %v727, %v723
    %v1168 = vpack.c.bf16 %v729, %v725
    %v1169 = vpack.c.bf16 %v888, %v884
    %v1170 = vpack.c.bf16 %v890, %v886
    %v1171 = vpack.c.bf16 %v1049, %v1045
    %v1172 = vpack.c.bf16 %v1051, %v1047
    %v1173 = vpack.c.bf16 %v576, %v572
    %v1174 = vpack.c.bf16 %v578, %v574
    %v1175 = vpack.c.bf16 %v737, %v733
    %v1176 = vpack.c.bf16 %v739, %v735
    %v1177 = vpack.c.bf16 %v898, %v894
    %v1178 = vpack.c.bf16 %v900, %v896
    %v1179 = vpack.c.bf16 %v1059, %v1055
    %v1180 = vpack.c.bf16 %v1061, %v1057
    %v1181 = vpack.c.bf16 %v586, %v582
    %v1182 = vpack.c.bf16 %v588, %v584
    %v1183 = vpack.c.bf16 %v747, %v743
    %v1184 = vpack.c.bf16 %v749, %v745
    %v1185 = vpack.c.bf16 %v908, %v904
    %v1186 = vpack.c.bf16 %v910, %v906
    %v1187 = vpack.c.bf16 %v1069, %v1065
    %v1188 = vpack.c.bf16 %v1071, %v1067
    %v1189 = vpack.c.bf16 %v596, %v592
    %v1190 = vpack.c.bf16 %v598, %v594
    %v1191 = vpack.c.bf16 %v757, %v753
    %v1192 = vpack.c.bf16 %v759, %v755
    %v1193 = vpack.c.bf16 %v918, %v914
    %v1194 = vpack.c.bf16 %v920, %v916
    %v1195 = vpack.c.bf16 %v1079, %v1075
    %v1196 = vpack.c.bf16 %v1081, %v1077
    %v1197 = vpack.c.bf16 %v606, %v602
    %v1198 = vpack.c.bf16 %v608, %v604
    %v1199 = vpack.c.bf16 %v767, %v763
    %v1200 = vpack.c.bf16 %v769, %v765
    %v1201 = vpack.c.bf16 %v928, %v924
    %v1202 = vpack.c.bf16 %v930, %v926
    %v1203 = vpack.c.bf16 %v1089, %v1085
    %v1204 = vpack.c.bf16 %v1091, %v1087
    %v1205 = vpack.c.bf16 %v616, %v612
    %v1206 = vpack.c.bf16 %v618, %v614
    %v1207 = vpack.c.bf16 %v777, %v773
    %v1208 = vpack.c.bf16 %v779, %v775
    %v1209 = vpack.c.bf16 %v938, %v934
    %v1210 = vpack.c.bf16 %v940, %v936
    %v1211 = vpack.c.bf16 %v1099, %v1095
    %v1212 = vpack.c.bf16 %v1101, %v1097
    %v1213 = vpack.c.bf16 %v626, %v622
    %v1214 = vpack.c.bf16 %v628, %v624
    %v1215 = vpack.c.bf16 %v787, %v783
    %v1216 = vpack.c.bf16 %v789, %v785
    %v1217 = vpack.c.bf16 %v948, %v944
    %v1218 = vpack.c.bf16 %v950, %v946
    %v1219 = vpack.c.bf16 %v1109, %v1105
    %v1220 = vpack.c.bf16 %v1111, %v1107
    %v1221 = vpack.c.bf16 %v636, %v632
    %v1222 = vpack.c.bf16 %v638, %v634
    %v1223 = vpack.c.bf16 %v797, %v793
    %v1224 = vpack.c.bf16 %v799, %v795
    %v1225 = vpack.c.bf16 %v958, %v954
    %v1226 = vpack.c.bf16 %v960, %v956
    %v1227 = vpack.c.bf16 %v1119, %v1115
    %v1228 = vpack.c.bf16 %v1121, %v1117
    %v1229 = vpack.c.bf16 %v646, %v642
    %v1230 = vpack.c.bf16 %v648, %v644
    %v1231 = vpack.c.bf16 %v807, %v803
    %v1232 = vpack.c.bf16 %v809, %v805
    %v1233 = vpack.c.bf16 %v968, %v964
    %v1234 = vpack.c.bf16 %v970, %v966
    %v1235 = vpack.c.bf16 %v1129, %v1125
    %v1236 = vpack.c.bf16 %v1131, %v1127
    %v1237 = vpack.c.bf16 %v652, %v652
    %v1238 = vpack.c.bf16 %v654, %v654
    %v1239 = vpack.c.bf16 %v813, %v813
    %v1240 = vpack.c.bf16 %v815, %v815
    %v1241 = vpack.c.bf16 %v974, %v974
    %v1242 = vpack.c.bf16 %v976, %v976
    %v1243 = vpack.c.bf16 %v1135, %v1135
    %v1244 = vpack.c.bf16 %v1137, %v1137
    %v1245 = vld [vmem:[#allocation6] sm:$0xff]
    %v1247 = vlaneseq
    %v1248 = vshrl.u32 %v1247, 7
    %v1249 = vsub.s32 0, %v1248
    %v1250 = vrot.slane %v1245, %v1249
    %v1251 = vlaneseq
    %v1252 = vshrl.u32 %v1251, 7
    %v1253 = vsub.s32 1, %v1252
    %v1254 = vrot.slane %v1245, %v1253
    %v1255 = vlaneseq
    %v1256 = vshrl.u32 %v1255, 7
    %v1257 = vsub.s32 2, %v1256
    %v1258 = vrot.slane %v1245, %v1257
    %v1259 = vlaneseq
    %v1260 = vshrl.u32 %v1259, 7
    %v1261 = vsub.s32 3, %v1260
    %v1262 = vrot.slane %v1245, %v1261
    %v1263 = vlaneseq
    %v1264 = vshrl.u32 %v1263, 7
    %v1265 = vsub.s32 4, %v1264
    %v1266 = vrot.slane %v1245, %v1265
    %v1267 = vlaneseq
    %v1268 = vshrl.u32 %v1267, 7
    %v1269 = vsub.s32 5, %v1268
    %v1270 = vrot.slane %v1245, %v1269
    %v1271 = vlaneseq
    %v1272 = vshrl.u32 %v1271, 7
    %v1273 = vsub.s32 6, %v1272
    %v1274 = vrot.slane %v1245, %v1273
    %v1275 = vlaneseq
    %v1276 = vshrl.u32 %v1275, 7
    %v1277 = vsub.s32 7, %v1276
    %v1278 = vrot.slane %v1245, %v1277
    %v1287 = vpack.c.bf16 %v1250, %v1250
    %v1288 = vpack.c.bf16 %v1254, %v1254
    %v1289 = vpack.c.bf16 %v1258, %v1258
    %v1290 = vpack.c.bf16 %v1262, %v1262
    %v1291 = vpack.c.bf16 %v1266, %v1266
    %v1292 = vpack.c.bf16 %v1270, %v1270
    %v1293 = vpack.c.bf16 %v1274, %v1274
    %v1294 = vpack.c.bf16 %v1278, %v1278
    %v1296 = vpack.i.b16 %v1287, %v1287
    %v1298 = vlaneseq
    %v1299 = vshrl.u32 %v1298, 7
    %v1300 = vsub.s32 0, %v1299
    %v1301 = vrot.slane %v1296, %v1300
    %v1303 = vpack.i.b16 %v1288, %v1288
    %v1305 = vlaneseq
    %v1306 = vshrl.u32 %v1305, 7
    %v1307 = vsub.s32 0, %v1306
    %v1308 = vrot.slane %v1303, %v1307
    %v1310 = vpack.i.b16 %v1289, %v1289
    %v1312 = vlaneseq
    %v1313 = vshrl.u32 %v1312, 7
    %v1314 = vsub.s32 0, %v1313
    %v1315 = vrot.slane %v1310, %v1314
    %v1317 = vpack.i.b16 %v1290, %v1290
    %v1319 = vlaneseq
    %v1320 = vshrl.u32 %v1319, 7
    %v1321 = vsub.s32 0, %v1320
    %v1322 = vrot.slane %v1317, %v1321
    %v1324 = vpack.i.b16 %v1291, %v1291
    %v1326 = vlaneseq
    %v1327 = vshrl.u32 %v1326, 7
    %v1328 = vsub.s32 0, %v1327
    %v1329 = vrot.slane %v1324, %v1328
    %v1331 = vpack.i.b16 %v1292, %v1292
    %v1333 = vlaneseq
    %v1334 = vshrl.u32 %v1333, 7
    %v1335 = vsub.s32 0, %v1334
    %v1336 = vrot.slane %v1331, %v1335
    %v1338 = vpack.i.b16 %v1293, %v1293
    %v1340 = vlaneseq
    %v1341 = vshrl.u32 %v1340, 7
    %v1342 = vsub.s32 0, %v1341
    %v1343 = vrot.slane %v1338, %v1342
    %v1345 = vpack.i.b16 %v1294, %v1294
    %v1347 = vlaneseq
    %v1348 = vshrl.u32 %v1347, 7
    %v1349 = vsub.s32 0, %v1348
    %v1350 = vrot.slane %v1345, %v1349
    %v1351 = vadd.bf16 %v1141, %v1301
    %v1352 = vadd.bf16 %v1142, %v1308
    %v1353 = vadd.bf16 %v1143, %v1315
    %v1354 = vadd.bf16 %v1144, %v1322
    %v1355 = vadd.bf16 %v1145, %v1329
    %v1356 = vadd.bf16 %v1146, %v1336
    %v1357 = vadd.bf16 %v1147, %v1343
    %v1358 = vadd.bf16 %v1148, %v1350
    %v1359 = vadd.bf16 %v1149, %v1301
    %v1360 = vadd.bf16 %v1150, %v1308
    %v1361 = vadd.bf16 %v1151, %v1315
    %v1362 = vadd.bf16 %v1152, %v1322
    %v1363 = vadd.bf16 %v1153, %v1329
    %v1364 = vadd.bf16 %v1154, %v1336
    %v1365 = vadd.bf16 %v1155, %v1343
    %v1366 = vadd.bf16 %v1156, %v1350
    %v1367 = vadd.bf16 %v1157, %v1301
    %v1368 = vadd.bf16 %v1158, %v1308
    %v1369 = vadd.bf16 %v1159, %v1315
    %v1370 = vadd.bf16 %v1160, %v1322
    %v1371 = vadd.bf16 %v1161, %v1329
    %v1372 = vadd.bf16 %v1162, %v1336
    %v1373 = vadd.bf16 %v1163, %v1343
    %v1374 = vadd.bf16 %v1164, %v1350
    %v1375 = vadd.bf16 %v1165, %v1301
    %v1376 = vadd.bf16 %v1166, %v1308
    %v1377 = vadd.bf16 %v1167, %v1315
    %v1378 = vadd.bf16 %v1168, %v1322
    %v1379 = vadd.bf16 %v1169, %v1329
    %v1380 = vadd.bf16 %v1170, %v1336
    %v1381 = vadd.bf16 %v1171, %v1343
    %v1382 = vadd.bf16 %v1172, %v1350
    %v1383 = vadd.bf16 %v1173, %v1301
    %v1384 = vadd.bf16 %v1174, %v1308
    %v1385 = vadd.bf16 %v1175, %v1315
    %v1386 = vadd.bf16 %v1176, %v1322
    %v1387 = vadd.bf16 %v1177, %v1329
    %v1388 = vadd.bf16 %v1178, %v1336
    %v1389 = vadd.bf16 %v1179, %v1343
    %v1390 = vadd.bf16 %v1180, %v1350
    %v1391 = vadd.bf16 %v1181, %v1301
    %v1392 = vadd.bf16 %v1182, %v1308
    %v1393 = vadd.bf16 %v1183, %v1315
    %v1394 = vadd.bf16 %v1184, %v1322
    %v1395 = vadd.bf16 %v1185, %v1329
    %v1396 = vadd.bf16 %v1186, %v1336
    %v1397 = vadd.bf16 %v1187, %v1343
    %v1398 = vadd.bf16 %v1188, %v1350
    %v1399 = vadd.bf16 %v1189, %v1301
    %v1400 = vadd.bf16 %v1190, %v1308
    %v1401 = vadd.bf16 %v1191, %v1315
    %v1402 = vadd.bf16 %v1192, %v1322
    %v1403 = vadd.bf16 %v1193, %v1329
    %v1404 = vadd.bf16 %v1194, %v1336
    %v1405 = vadd.bf16 %v1195, %v1343
    %v1406 = vadd.bf16 %v1196, %v1350
    %v1407 = vadd.bf16 %v1197, %v1301
    %v1408 = vadd.bf16 %v1198, %v1308
    %v1409 = vadd.bf16 %v1199, %v1315
    %v1410 = vadd.bf16 %v1200, %v1322
    %v1411 = vadd.bf16 %v1201, %v1329
    %v1412 = vadd.bf16 %v1202, %v1336
    %v1413 = vadd.bf16 %v1203, %v1343
    %v1414 = vadd.bf16 %v1204, %v1350
    %v1415 = vadd.bf16 %v1205, %v1301
    %v1416 = vadd.bf16 %v1206, %v1308
    %v1417 = vadd.bf16 %v1207, %v1315
    %v1418 = vadd.bf16 %v1208, %v1322
    %v1419 = vadd.bf16 %v1209, %v1329
    %v1420 = vadd.bf16 %v1210, %v1336
    %v1421 = vadd.bf16 %v1211, %v1343
    %v1422 = vadd.bf16 %v1212, %v1350
    %v1423 = vadd.bf16 %v1213, %v1301
    %v1424 = vadd.bf16 %v1214, %v1308
    %v1425 = vadd.bf16 %v1215, %v1315
    %v1426 = vadd.bf16 %v1216, %v1322
    %v1427 = vadd.bf16 %v1217, %v1329
    %v1428 = vadd.bf16 %v1218, %v1336
    %v1429 = vadd.bf16 %v1219, %v1343
    %v1430 = vadd.bf16 %v1220, %v1350
    %v1431 = vadd.bf16 %v1221, %v1301
    %v1432 = vadd.bf16 %v1222, %v1308
    %v1433 = vadd.bf16 %v1223, %v1315
    %v1434 = vadd.bf16 %v1224, %v1322
    %v1435 = vadd.bf16 %v1225, %v1329
    %v1436 = vadd.bf16 %v1226, %v1336
    %v1437 = vadd.bf16 %v1227, %v1343
    %v1438 = vadd.bf16 %v1228, %v1350
    %v1439 = vadd.bf16 %v1229, %v1301
    %v1440 = vadd.bf16 %v1230, %v1308
    %v1441 = vadd.bf16 %v1231, %v1315
    %v1442 = vadd.bf16 %v1232, %v1322
    %v1443 = vadd.bf16 %v1233, %v1329
    %v1444 = vadd.bf16 %v1234, %v1336
    %v1445 = vadd.bf16 %v1235, %v1343
    %v1446 = vadd.bf16 %v1236, %v1350
    %v1447 = vadd.bf16 %v1237, %v1301
    %v1448 = vadd.bf16 %v1238, %v1308
    %v1449 = vadd.bf16 %v1239, %v1315
    %v1450 = vadd.bf16 %v1240, %v1322
    %v1451 = vadd.bf16 %v1241, %v1329
    %v1452 = vadd.bf16 %v1242, %v1336
    %v1453 = vadd.bf16 %v1243, %v1343
    %v1454 = vadd.bf16 %v1244, %v1350
    %v1455 = vmul.bf16 %v1351, 1036860877
    %v1456 = vmul.bf16 %v1352, 1036860877
    %v1457 = vmul.bf16 %v1353, 1036860877
    %v1458 = vmul.bf16 %v1354, 1036860877
    %v1459 = vmul.bf16 %v1355, 1036860877
    %v1460 = vmul.bf16 %v1356, 1036860877
    %v1461 = vmul.bf16 %v1357, 1036860877
    %v1462 = vmul.bf16 %v1358, 1036860877
    %v1463 = vmul.bf16 %v1359, 1036860877
    %v1464 = vmul.bf16 %v1360, 1036860877
    %v1465 = vmul.bf16 %v1361, 1036860877
    %v1466 = vmul.bf16 %v1362, 1036860877
    %v1467 = vmul.bf16 %v1363, 1036860877
    %v1468 = vmul.bf16 %v1364, 1036860877
    %v1469 = vmul.bf16 %v1365, 1036860877
    %v1470 = vmul.bf16 %v1366, 1036860877
    %v1471 = vmul.bf16 %v1367, 1036860877
    %v1472 = vmul.bf16 %v1368, 1036860877
    %v1473 = vmul.bf16 %v1369, 1036860877
    %v1474 = vmul.bf16 %v1370, 1036860877
    %v1475 = vmul.bf16 %v1371, 1036860877
    %v1476 = vmul.bf16 %v1372, 1036860877
    %v1477 = vmul.bf16 %v1373, 1036860877
    %v1478 = vmul.bf16 %v1374, 1036860877
    %v1479 = vmul.bf16 %v1375, 1036860877
    %v1480 = vmul.bf16 %v1376, 1036860877
    %v1481 = vmul.bf16 %v1377, 1036860877
    %v1482 = vmul.bf16 %v1378, 1036860877
    %v1483 = vmul.bf16 %v1379, 1036860877
    %v1484 = vmul.bf16 %v1380, 1036860877
    %v1485 = vmul.bf16 %v1381, 1036860877
    %v1486 = vmul.bf16 %v1382, 1036860877
    %v1487 = vmul.bf16 %v1383, 1036860877
    %v1488 = vmul.bf16 %v1384, 1036860877
    %v1489 = vmul.bf16 %v1385, 1036860877
    %v1490 = vmul.bf16 %v1386, 1036860877
    %v1491 = vmul.bf16 %v1387, 1036860877
    %v1492 = vmul.bf16 %v1388, 1036860877
    %v1493 = vmul.bf16 %v1389, 1036860877
    %v1494 = vmul.bf16 %v1390, 1036860877
    %v1495 = vmul.bf16 %v1391, 1036860877
    %v1496 = vmul.bf16 %v1392, 1036860877
    %v1497 = vmul.bf16 %v1393, 1036860877
    %v1498 = vmul.bf16 %v1394, 1036860877
    %v1499 = vmul.bf16 %v1395, 1036860877
    %v1500 = vmul.bf16 %v1396, 1036860877
    %v1501 = vmul.bf16 %v1397, 1036860877
    %v1502 = vmul.bf16 %v1398, 1036860877
    %v1503 = vmul.bf16 %v1399, 1036860877
    %v1504 = vmul.bf16 %v1400, 1036860877
    %v1505 = vmul.bf16 %v1401, 1036860877
    %v1506 = vmul.bf16 %v1402, 1036860877
    %v1507 = vmul.bf16 %v1403, 1036860877
    %v1508 = vmul.bf16 %v1404, 1036860877
    %v1509 = vmul.bf16 %v1405, 1036860877
    %v1510 = vmul.bf16 %v1406, 1036860877
    %v1511 = vmul.bf16 %v1407, 1036860877
    %v1512 = vmul.bf16 %v1408, 1036860877
    %v1513 = vmul.bf16 %v1409, 1036860877
    %v1514 = vmul.bf16 %v1410, 1036860877
    %v1515 = vmul.bf16 %v1411, 1036860877
    %v1516 = vmul.bf16 %v1412, 1036860877
    %v1517 = vmul.bf16 %v1413, 1036860877
    %v1518 = vmul.bf16 %v1414, 1036860877
    %v1519 = vmul.bf16 %v1415, 1036860877
    %v1520 = vmul.bf16 %v1416, 1036860877
    %v1521 = vmul.bf16 %v1417, 1036860877
    %v1522 = vmul.bf16 %v1418, 1036860877
    %v1523 = vmul.bf16 %v1419, 1036860877
    %v1524 = vmul.bf16 %v1420, 1036860877
    %v1525 = vmul.bf16 %v1421, 1036860877
    %v1526 = vmul.bf16 %v1422, 1036860877
    %v1527 = vmul.bf16 %v1423, 1036860877
    %v1528 = vmul.bf16 %v1424, 1036860877
    %v1529 = vmul.bf16 %v1425, 1036860877
    %v1530 = vmul.bf16 %v1426, 1036860877
    %v1531 = vmul.bf16 %v1427, 1036860877
    %v1532 = vmul.bf16 %v1428, 1036860877
    %v1533 = vmul.bf16 %v1429, 1036860877
    %v1534 = vmul.bf16 %v1430, 1036860877
    %v1535 = vmul.bf16 %v1431, 1036860877
    %v1536 = vmul.bf16 %v1432, 1036860877
    %v1537 = vmul.bf16 %v1433, 1036860877
    %v1538 = vmul.bf16 %v1434, 1036860877
    %v1539 = vmul.bf16 %v1435, 1036860877
    %v1540 = vmul.bf16 %v1436, 1036860877
    %v1541 = vmul.bf16 %v1437, 1036860877
    %v1542 = vmul.bf16 %v1438, 1036860877
    %v1543 = vmul.bf16 %v1439, 1036860877
    %v1544 = vmul.bf16 %v1440, 1036860877
    %v1545 = vmul.bf16 %v1441, 1036860877
    %v1546 = vmul.bf16 %v1442, 1036860877
    %v1547 = vmul.bf16 %v1443, 1036860877
    %v1548 = vmul.bf16 %v1444, 1036860877
    %v1549 = vmul.bf16 %v1445, 1036860877
    %v1550 = vmul.bf16 %v1446, 1036860877
    %v1551 = vmul.bf16 %v1447, 1036860877
    %v1552 = vmul.bf16 %v1448, 1036860877
    %v1553 = vmul.bf16 %v1449, 1036860877
    %v1554 = vmul.bf16 %v1450, 1036860877
    %v1555 = vmul.bf16 %v1451, 1036860877
    %v1556 = vmul.bf16 %v1452, 1036860877
    %v1557 = vmul.bf16 %v1453, 1036860877
    %v1558 = vmul.bf16 %v1454, 1036860877
    %v1559 = vmax.bf16 %v1351, %v1455
    %v1560 = vmax.bf16 %v1352, %v1456
    %v1561 = vmax.bf16 %v1353, %v1457
    %v1562 = vmax.bf16 %v1354, %v1458
    %v1563 = vmax.bf16 %v1355, %v1459
    %v1564 = vmax.bf16 %v1356, %v1460
    %v1565 = vmax.bf16 %v1357, %v1461
    %v1566 = vmax.bf16 %v1358, %v1462
    %v1567 = vmax.bf16 %v1359, %v1463
    %v1568 = vmax.bf16 %v1360, %v1464
    %v1569 = vmax.bf16 %v1361, %v1465
    %v1570 = vmax.bf16 %v1362, %v1466
    %v1571 = vmax.bf16 %v1363, %v1467
    %v1572 = vmax.bf16 %v1364, %v1468
    %v1573 = vmax.bf16 %v1365, %v1469
    %v1574 = vmax.bf16 %v1366, %v1470
    %v1575 = vmax.bf16 %v1367, %v1471
    %v1576 = vmax.bf16 %v1368, %v1472
    %v1577 = vmax.bf16 %v1369, %v1473
    %v1578 = vmax.bf16 %v1370, %v1474
    %v1579 = vmax.bf16 %v1371, %v1475
    %v1580 = vmax.bf16 %v1372, %v1476
    %v1581 = vmax.bf16 %v1373, %v1477
    %v1582 = vmax.bf16 %v1374, %v1478
    %v1583 = vmax.bf16 %v1375, %v1479
    %v1584 = vmax.bf16 %v1376, %v1480
    %v1585 = vmax.bf16 %v1377, %v1481
    %v1586 = vmax.bf16 %v1378, %v1482
    %v1587 = vmax.bf16 %v1379, %v1483
    %v1588 = vmax.bf16 %v1380, %v1484
    %v1589 = vmax.bf16 %v1381, %v1485
    %v1590 = vmax.bf16 %v1382, %v1486
    %v1591 = vmax.bf16 %v1383, %v1487
    %v1592 = vmax.bf16 %v1384, %v1488
    %v1593 = vmax.bf16 %v1385, %v1489
    %v1594 = vmax.bf16 %v1386, %v1490
    %v1595 = vmax.bf16 %v1387, %v1491
    %v1596 = vmax.bf16 %v1388, %v1492
    %v1597 = vmax.bf16 %v1389, %v1493
    %v1598 = vmax.bf16 %v1390, %v1494
    %v1599 = vmax.bf16 %v1391, %v1495
    %v1600 = vmax.bf16 %v1392, %v1496
    %v1601 = vmax.bf16 %v1393, %v1497
    %v1602 = vmax.bf16 %v1394, %v1498
    %v1603 = vmax.bf16 %v1395, %v1499
    %v1604 = vmax.bf16 %v1396, %v1500
    %v1605 = vmax.bf16 %v1397, %v1501
    %v1606 = vmax.bf16 %v1398, %v1502
    %v1607 = vmax.bf16 %v1399, %v1503
    %v1608 = vmax.bf16 %v1400, %v1504
    %v1609 = vmax.bf16 %v1401, %v1505
    %v1610 = vmax.bf16 %v1402, %v1506
    %v1611 = vmax.bf16 %v1403, %v1507
    %v1612 = vmax.bf16 %v1404, %v1508
    %v1613 = vmax.bf16 %v1405, %v1509
    %v1614 = vmax.bf16 %v1406, %v1510
    %v1615 = vmax.bf16 %v1407, %v1511
    %v1616 = vmax.bf16 %v1408, %v1512
    %v1617 = vmax.bf16 %v1409, %v1513
    %v1618 = vmax.bf16 %v1410, %v1514
    %v1619 = vmax.bf16 %v1411, %v1515
    %v1620 = vmax.bf16 %v1412, %v1516
    %v1621 = vmax.bf16 %v1413, %v1517
    %v1622 = vmax.bf16 %v1414, %v1518
    %v1623 = vmax.bf16 %v1415, %v1519
    %v1624 = vmax.bf16 %v1416, %v1520
    %v1625 = vmax.bf16 %v1417, %v1521
    %v1626 = vmax.bf16 %v1418, %v1522
    %v1627 = vmax.bf16 %v1419, %v1523
    %v1628 = vmax.bf16 %v1420, %v1524
    %v1629 = vmax.bf16 %v1421, %v1525
    %v1630 = vmax.bf16 %v1422, %v1526
    %v1631 = vmax.bf16 %v1423, %v1527
    %v1632 = vmax.bf16 %v1424, %v1528
    %v1633 = vmax.bf16 %v1425, %v1529
    %v1634 = vmax.bf16 %v1426, %v1530
    %v1635 = vmax.bf16 %v1427, %v1531
    %v1636 = vmax.bf16 %v1428, %v1532
    %v1637 = vmax.bf16 %v1429, %v1533
    %v1638 = vmax.bf16 %v1430, %v1534
    %v1639 = vmax.bf16 %v1431, %v1535
    %v1640 = vmax.bf16 %v1432, %v1536
    %v1641 = vmax.bf16 %v1433, %v1537
    %v1642 = vmax.bf16 %v1434, %v1538
    %v1643 = vmax.bf16 %v1435, %v1539
    %v1644 = vmax.bf16 %v1436, %v1540
    %v1645 = vmax.bf16 %v1437, %v1541
    %v1646 = vmax.bf16 %v1438, %v1542
    %v1647 = vmax.bf16 %v1439, %v1543
    %v1648 = vmax.bf16 %v1440, %v1544
    %v1649 = vmax.bf16 %v1441, %v1545
    %v1650 = vmax.bf16 %v1442, %v1546
    %v1651 = vmax.bf16 %v1443, %v1547
    %v1652 = vmax.bf16 %v1444, %v1548
    %v1653 = vmax.bf16 %v1445, %v1549
    %v1654 = vmax.bf16 %v1446, %v1550
    %v1655 = vmax.bf16 %v1447, %v1551
    %v1656 = vmax.bf16 %v1448, %v1552
    %v1657 = vmax.bf16 %v1449, %v1553
    %v1658 = vmax.bf16 %v1450, %v1554
    %v1659 = vmax.bf16 %v1451, %v1555
    %v1660 = vmax.bf16 %v1452, %v1556
    %v1661 = vmax.bf16 %v1453, %v1557
    %v1662 = vmax.bf16 %v1454, %v1558
    %v1663 = vld [vmem:[#allocation7] sm:$0xf]
    %v1664 = vld [vmem:[#allocation7 + $0x4] sm:$0xf]
    %v1665 = vld [vmem:[#allocation7 + $0x8] sm:$0xf]
    %v1666 = vld [vmem:[#allocation7 + $0xc] sm:$0xf]
    %v1667 = vld [vmem:[#allocation7 + $0x10] sm:$0xf]
    %v1668 = vld [vmem:[#allocation7 + $0x14] sm:$0xf]
    %v1669 = vld [vmem:[#allocation7 + $0x18] sm:$0xf]
    %v1670 = vld [vmem:[#allocation7 + $0x1c] sm:$0xf]
    %v1671 = vld [vmem:[#allocation7 + $0x20] sm:$0xf]
    %v1672 = vld [vmem:[#allocation7 + $0x24] sm:$0xf]
    %v1673 = vld [vmem:[#allocation7 + $0x28] sm:$0xf]
    %v1674 = vld [vmem:[#allocation7 + $0x2c] sm:$0xf]
    %v1675 = vld [vmem:[#allocation7 + $0x30] sm:$0xf]
    %v1676 = vld [vmem:[#allocation7 + $0x34] sm:$0xf]
    %v1677 = vld [vmem:[#allocation7 + $0x38] sm:$0xf]
    %v1678 = vld [vmem:[#allocation7 + $0x3c] sm:$0xf]
    %v1679 = vld [vmem:[#allocation7 + $0x40] sm:$0xf]
    %v1680 = vld [vmem:[#allocation7 + $0x44] sm:$0xf]
    %v1681 = vld [vmem:[#allocation7 + $0x48] sm:$0xf]
    %v1682 = vld [vmem:[#allocation7 + $0x4c] sm:$0xf]
    %v1683 = vld [vmem:[#allocation7 + $0x50] sm:$0xf]
    %v1684 = vld [vmem:[#allocation7 + $0x54] sm:$0xf]
    %v1685 = vld [vmem:[#allocation7 + $0x58] sm:$0xf]
    %v1686 = vld [vmem:[#allocation7 + $0x5c] sm:$0xf]
    %v1687 = vld [vmem:[#allocation7 + $0x60] sm:$0xf]
    %v1688 = vld [vmem:[#allocation7 + $0x64] sm:$0xf]
    %v1689 = vld [vmem:[#allocation7 + $0x68] sm:$0xf]
    %v1690 = vld [vmem:[#allocation7 + $0x6c] sm:$0xf]
    %v1691 = vld [vmem:[#allocation7 + $0x70] sm:$0xf]
    %v1692 = vld [vmem:[#allocation7 + $0x74] sm:$0xf]
    %v1693 = vld [vmem:[#allocation7 + $0x78] sm:$0xf]
    %v1694 = vld [vmem:[#allocation7 + $0x7c] sm:$0xf]
    %v1695 = vld [vmem:[#allocation7 + $0x80] sm:$0xf]
    %v1696 = vld [vmem:[#allocation7 + $0x84] sm:$0xf]
    %v1697 = vld [vmem:[#allocation7 + $0x88] sm:$0xf]
    %v1698 = vld [vmem:[#allocation7 + $0x8c] sm:$0xf]
    %v1699 = vld [vmem:[#allocation7 + $0x90] sm:$0xf]
    %v1700 = vld [vmem:[#allocation7 + $0x94] sm:$0xf]
    %v1701 = vld [vmem:[#allocation7 + $0x98] sm:$0xf]
    %v1702 = vld [vmem:[#allocation7 + $0x9c] sm:$0xf]
    %v1703 = vld [vmem:[#allocation7 + $0xa0] sm:$0xf]
    %v1704 = vld [vmem:[#allocation7 + $0xa4] sm:$0xf]
    %v1705 = vld [vmem:[#allocation7 + $0xa8] sm:$0xf]
    %v1706 = vld [vmem:[#allocation7 + $0xac] sm:$0xf]
    %v1707 = vld [vmem:[#allocation7 + $0xb0] sm:$0xf]
    %v1708 = vld [vmem:[#allocation7 + $0xb4] sm:$0xf]
    %v1709 = vld [vmem:[#allocation7 + $0xb8] sm:$0xf]
    %v1710 = vld [vmem:[#allocation7 + $0xbc] sm:$0xf]
    %v1711 = vld [vmem:[#allocation7 + $0xc0] sm:$0xf]
    %v1712 = vld [vmem:[#allocation7 + $0xc4] sm:$0xf]
    %v1713 = vld [vmem:[#allocation7 + $0xc8] sm:$0xf]
    %v1714 = vld [vmem:[#allocation7 + $0xcc] sm:$0xf]
    %v1715 = vld [vmem:[#allocation7 + $0xd0] sm:$0xf]
    %v1716 = vld [vmem:[#allocation7 + $0xd4] sm:$0xf]
    %v1717 = vld [vmem:[#allocation7 + $0xd8] sm:$0xf]
    %v1718 = vld [vmem:[#allocation7 + $0xdc] sm:$0xf]
    %v1719 = vld [vmem:[#allocation7 + $0xe0] sm:$0xf]
    %v1720 = vld [vmem:[#allocation7 + $0xe4] sm:$0xf]
    %v1721 = vld [vmem:[#allocation7 + $0xe8] sm:$0xf]
    %v1722 = vld [vmem:[#allocation7 + $0xec] sm:$0xf]
    %v1723 = vld [vmem:[#allocation7 + $0xf0] sm:$0xf]
    %v1724 = vld [vmem:[#allocation7 + $0xf4] sm:$0xf]
    %v1725 = vld [vmem:[#allocation7 + $0xf8] sm:$0xf]
    %v1726 = vld [vmem:[#allocation7 + $0xfc] sm:$0xf]
    %v1727 = vld [vmem:[#allocation7 + $0x100] sm:$0xf]
    %v1728 = vld [vmem:[#allocation7 + $0x104] sm:$0xf]
    %v1729 = vld [vmem:[#allocation7 + $0x108] sm:$0xf]
    %v1730 = vld [vmem:[#allocation7 + $0x10c] sm:$0xf]
    %v1731 = vld [vmem:[#allocation7 + $0x110] sm:$0xf]
    %v1732 = vld [vmem:[#allocation7 + $0x114] sm:$0xf]
    %v1733 = vld [vmem:[#allocation7 + $0x118] sm:$0xf]
    %v1734 = vld [vmem:[#allocation7 + $0x11c] sm:$0xf]
    %v1735 = vld [vmem:[#allocation7 + $0x120] sm:$0xf]
    %v1736 = vld [vmem:[#allocation7 + $0x124] sm:$0xf]
    %v1737 = vld [vmem:[#allocation7 + $0x128] sm:$0xf]
    %v1738 = vld [vmem:[#allocation7 + $0x12c] sm:$0xf]
    %v1739 = vld [vmem:[#allocation7 + $0x130] sm:$0xf]
    %v1740 = vld [vmem:[#allocation7 + $0x134] sm:$0xf]
    %v1741 = vld [vmem:[#allocation7 + $0x138] sm:$0xf]
    %v1742 = vld [vmem:[#allocation7 + $0x13c] sm:$0xf]
    %v1743 = vld [vmem:[#allocation7 + $0x140] sm:$0xf]
    %v1744 = vld [vmem:[#allocation7 + $0x144] sm:$0xf]
    %v1745 = vld [vmem:[#allocation7 + $0x148] sm:$0xf]
    %v1746 = vld [vmem:[#allocation7 + $0x14c] sm:$0xf]
    %v1747 = vld [vmem:[#allocation7 + $0x150] sm:$0xf]
    %v1748 = vld [vmem:[#allocation7 + $0x154] sm:$0xf]
    %v1749 = vld [vmem:[#allocation7 + $0x158] sm:$0xf]
    %v1750 = vld [vmem:[#allocation7 + $0x15c] sm:$0xf]
    %v1751 = vld [vmem:[#allocation7 + $0x160] sm:$0xf]
    %v1752 = vld [vmem:[#allocation7 + $0x164] sm:$0xf]
    %v1753 = vld [vmem:[#allocation7 + $0x168] sm:$0xf]
    %v1754 = vld [vmem:[#allocation7 + $0x16c] sm:$0xf]
    %v1755 = vld [vmem:[#allocation7 + $0x170] sm:$0xf]
    %v1756 = vld [vmem:[#allocation7 + $0x174] sm:$0xf]
    %v1757 = vld [vmem:[#allocation7 + $0x178] sm:$0xf]
    %v1758 = vld [vmem:[#allocation7 + $0x17c] sm:$0xf]
    %v1759 = vld [vmem:[#allocation7 + $0x180] sm:$0xf]
    %v1760 = vld [vmem:[#allocation7 + $0x184] sm:$0xf]
    %v1761 = vld [vmem:[#allocation7 + $0x188] sm:$0xf]
    %v1762 = vld [vmem:[#allocation7 + $0x18c] sm:$0xf]
    %v1763 = vld [vmem:[#allocation7 + $0x190] sm:$0xf]
    %v1764 = vld [vmem:[#allocation7 + $0x194] sm:$0xf]
    %v1765 = vld [vmem:[#allocation7 + $0x198] sm:$0xf]
    %v1766 = vld [vmem:[#allocation7 + $0x19c] sm:$0xf]
    %v1767 = vld [vmem:[#allocation7 + $0x1a0] sm:$0xf]
    %v1768 = vld [vmem:[#allocation7 + $0x1a4] sm:$0xf]
    %v1769 = vld [vmem:[#allocation7 + $0x1a8] sm:$0xf]
    %v1770 = vld [vmem:[#allocation7 + $0x1ac] sm:$0xf]
    %v1771 = vld [vmem:[#allocation7 + $0x1b0] sm:$0xf]
    %v1772 = vld [vmem:[#allocation7 + $0x1b4] sm:$0xf]
    %v1773 = vld [vmem:[#allocation7 + $0x1b8] sm:$0xf]
    %v1774 = vld [vmem:[#allocation7 + $0x1bc] sm:$0xf]
    %v1775 = vld [vmem:[#allocation7 + $0x1c0] sm:$0xf]
    %v1776 = vld [vmem:[#allocation7 + $0x1c4] sm:$0xf]
    %v1777 = vld [vmem:[#allocation7 + $0x1c8] sm:$0xf]
    %v1778 = vld [vmem:[#allocation7 + $0x1cc] sm:$0xf]
    %v1779 = vld [vmem:[#allocation7 + $0x1d0] sm:$0xf]
    %v1780 = vld [vmem:[#allocation7 + $0x1d4] sm:$0xf]
    %v1781 = vld [vmem:[#allocation7 + $0x1d8] sm:$0xf]
    %v1782 = vld [vmem:[#allocation7 + $0x1dc] sm:$0xf]
    %v1783 = vld [vmem:[#allocation7 + $0x1e0] sm:$0xf]
    %v1784 = vld [vmem:[#allocation7 + $0x1e4] sm:$0xf]
    %v1785 = vld [vmem:[#allocation7 + $0x1e8] sm:$0xf]
    %v1786 = vld [vmem:[#allocation7 + $0x1ec] sm:$0xf]
    %v1787 = vld [vmem:[#allocation7 + $0x1f0] sm:$0xf]
    %v1788 = vld [vmem:[#allocation7 + $0x1f4] sm:$0xf]
    %v1789 = vld [vmem:[#allocation7 + $0x1f8] sm:$0xf]
    %v1790 = vld [vmem:[#allocation7 + $0x1fc] sm:$0xf]
    %v1791 = vld [vmem:[%s4] sm:$0x1]
    %v1793 = vlaneseq
    %v1794 = vshrl.u32 %v1793, 7
    %v1795 = vsub.s32 0, %v1794
    %v1796 = vrot.slane %v1791, %v1795
    %v1926 = vunpack.c.l.b16 %v1663
    %v1927 = vunpack.c.l.b16 %v1664
    %v1928 = vunpack.c.l.b16 %v1665
    %v1929 = vunpack.c.l.b16 %v1666
    %v1930 = vunpack.c.l.b16 %v1667
    %v1931 = vunpack.c.l.b16 %v1668
    %v1932 = vunpack.c.l.b16 %v1669
    %v1933 = vunpack.c.l.b16 %v1670
    %v1934 = vunpack.c.l.b16 %v1671
    %v1935 = vunpack.c.l.b16 %v1672
    %v1936 = vunpack.c.l.b16 %v1673
    %v1937 = vunpack.c.l.b16 %v1674
    %v1938 = vunpack.c.l.b16 %v1675
    %v1939 = vunpack.c.l.b16 %v1676
    %v1940 = vunpack.c.l.b16 %v1677
    %v1941 = vunpack.c.l.b16 %v1678
    %v1942 = vunpack.c.l.b16 %v1679
    %v1943 = vunpack.c.l.b16 %v1680
    %v1944 = vunpack.c.l.b16 %v1681
    %v1945 = vunpack.c.l.b16 %v1682
    %v1946 = vunpack.c.l.b16 %v1683
    %v1947 = vunpack.c.l.b16 %v1684
    %v1948 = vunpack.c.l.b16 %v1685
    %v1949 = vunpack.c.l.b16 %v1686
    %v1950 = vunpack.c.l.b16 %v1687
    %v1951 = vunpack.c.l.b16 %v1688
    %v1952 = vunpack.c.l.b16 %v1689
    %v1953 = vunpack.c.l.b16 %v1690
    %v1954 = vunpack.c.l.b16 %v1691
    %v1955 = vunpack.c.l.b16 %v1692
    %v1956 = vunpack.c.l.b16 %v1693
    %v1957 = vunpack.c.l.b16 %v1694
    %v1958 = vunpack.c.l.b16 %v1695
    %v1959 = vunpack.c.l.b16 %v1696
    %v1960 = vunpack.c.l.b16 %v1697
    %v1961 = vunpack.c.l.b16 %v1698
    %v1962 = vunpack.c.l.b16 %v1699
    %v1963 = vunpack.c.l.b16 %v1700
    %v1964 = vunpack.c.l.b16 %v1701
    %v1965 = vunpack.c.l.b16 %v1702
    %v1966 = vunpack.c.l.b16 %v1703
    %v1967 = vunpack.c.l.b16 %v1704
    %v1968 = vunpack.c.l.b16 %v1705
    %v1969 = vunpack.c.l.b16 %v1706
    %v1970 = vunpack.c.l.b16 %v1707
    %v1971 = vunpack.c.l.b16 %v1708
    %v1972 = vunpack.c.l.b16 %v1709
    %v1973 = vunpack.c.l.b16 %v1710
    %v1974 = vunpack.c.l.b16 %v1711
    %v1975 = vunpack.c.l.b16 %v1712
    %v1976 = vunpack.c.l.b16 %v1713
    %v1977 = vunpack.c.l.b16 %v1714
    %v1978 = vunpack.c.l.b16 %v1715
    %v1979 = vunpack.c.l.b16 %v1716
    %v1980 = vunpack.c.l.b16 %v1717
    %v1981 = vunpack.c.l.b16 %v1718
    %v1982 = vunpack.c.l.b16 %v1719
    %v1983 = vunpack.c.l.b16 %v1720
    %v1984 = vunpack.c.l.b16 %v1721
    %v1985 = vunpack.c.l.b16 %v1722
    %v1986 = vunpack.c.l.b16 %v1723
    %v1987 = vunpack.c.l.b16 %v1724
    %v1988 = vunpack.c.l.b16 %v1725
    %v1989 = vunpack.c.l.b16 %v1726
    %v1990 = vunpack.c.l.b16 %v1727
    %v1991 = vunpack.c.l.b16 %v1728
    %v1992 = vunpack.c.l.b16 %v1729
    %v1993 = vunpack.c.l.b16 %v1730
    %v1994 = vunpack.c.l.b16 %v1731
    %v1995 = vunpack.c.l.b16 %v1732
    %v1996 = vunpack.c.l.b16 %v1733
    %v1997 = vunpack.c.l.b16 %v1734
    %v1998 = vunpack.c.l.b16 %v1735
    %v1999 = vunpack.c.l.b16 %v1736
    %v2000 = vunpack.c.l.b16 %v1737
    %v2001 = vunpack.c.l.b16 %v1738
    %v2002 = vunpack.c.l.b16 %v1739
    %v2003 = vunpack.c.l.b16 %v1740
    %v2004 = vunpack.c.l.b16 %v1741
    %v2005 = vunpack.c.l.b16 %v1742
    %v2006 = vunpack.c.l.b16 %v1743
    %v2007 = vunpack.c.l.b16 %v1744
    %v2008 = vunpack.c.l.b16 %v1745
    %v2009 = vunpack.c.l.b16 %v1746
    %v2010 = vunpack.c.l.b16 %v1747
    %v2011 = vunpack.c.l.b16 %v1748
    %v2012 = vunpack.c.l.b16 %v1749
    %v2013 = vunpack.c.l.b16 %v1750
    %v2014 = vunpack.c.l.b16 %v1751
    %v2015 = vunpack.c.l.b16 %v1752
    %v2016 = vunpack.c.l.b16 %v1753
    %v2017 = vunpack.c.l.b16 %v1754
    %v2018 = vunpack.c.l.b16 %v1755
    %v2019 = vunpack.c.l.b16 %v1756
    %v2020 = vunpack.c.l.b16 %v1757
    %v2021 = vunpack.c.l.b16 %v1758
    %v2022 = vunpack.c.l.b16 %v1759
    %v2023 = vunpack.c.l.b16 %v1760
    %v2024 = vunpack.c.l.b16 %v1761
    %v2025 = vunpack.c.l.b16 %v1762
    %v2026 = vunpack.c.l.b16 %v1763
    %v2027 = vunpack.c.l.b16 %v1764
    %v2028 = vunpack.c.l.b16 %v1765
    %v2029 = vunpack.c.l.b16 %v1766
    %v2030 = vunpack.c.l.b16 %v1767
    %v2031 = vunpack.c.l.b16 %v1768
    %v2032 = vunpack.c.l.b16 %v1769
    %v2033 = vunpack.c.l.b16 %v1770
    %v2034 = vunpack.c.l.b16 %v1771
    %v2035 = vunpack.c.l.b16 %v1772
    %v2036 = vunpack.c.l.b16 %v1773
    %v2037 = vunpack.c.l.b16 %v1774
    %v2038 = vunpack.c.l.b16 %v1775
    %v2039 = vunpack.c.l.b16 %v1776
    %v2040 = vunpack.c.l.b16 %v1777
    %v2041 = vunpack.c.l.b16 %v1778
    %v2042 = vunpack.c.l.b16 %v1779
    %v2043 = vunpack.c.l.b16 %v1780
    %v2044 = vunpack.c.l.b16 %v1781
    %v2045 = vunpack.c.l.b16 %v1782
    %v2046 = vunpack.c.l.b16 %v1783
    %v2047 = vunpack.c.l.b16 %v1784
    %v2048 = vunpack.c.l.b16 %v1785
    %v2049 = vunpack.c.l.b16 %v1786
    %v2050 = vunpack.c.l.b16 %v1787
    %v2051 = vunpack.c.l.b16 %v1788
    %v2052 = vunpack.c.l.b16 %v1789
    %v2053 = vunpack.c.l.b16 %v1790
    %v2054 = vpack.c.b16 %v1927, %v1926
    %v2055 = vpack.c.b16 %v1929, %v1928
    %v2056 = vpack.c.b16 %v1931, %v1930
    %v2057 = vpack.c.b16 %v1933, %v1932
    %v2058 = vpack.c.b16 %v1935, %v1934
    %v2059 = vpack.c.b16 %v1937, %v1936
    %v2060 = vpack.c.b16 %v1939, %v1938
    %v2061 = vpack.c.b16 %v1941, %v1940
    %v2062 = vpack.c.b16 %v1943, %v1942
    %v2063 = vpack.c.b16 %v1945, %v1944
    %v2064 = vpack.c.b16 %v1947, %v1946
    %v2065 = vpack.c.b16 %v1949, %v1948
    %v2066 = vpack.c.b16 %v1951, %v1950
    %v2067 = vpack.c.b16 %v1953, %v1952
    %v2068 = vpack.c.b16 %v1955, %v1954
    %v2069 = vpack.c.b16 %v1957, %v1956
    %v2070 = vpack.c.b16 %v1959, %v1958
    %v2071 = vpack.c.b16 %v1961, %v1960
    %v2072 = vpack.c.b16 %v1963, %v1962
    %v2073 = vpack.c.b16 %v1965, %v1964
    %v2074 = vpack.c.b16 %v1967, %v1966
    %v2075 = vpack.c.b16 %v1969, %v1968
    %v2076 = vpack.c.b16 %v1971, %v1970
    %v2077 = vpack.c.b16 %v1973, %v1972
    %v2078 = vpack.c.b16 %v1975, %v1974
    %v2079 = vpack.c.b16 %v1977, %v1976
    %v2080 = vpack.c.b16 %v1979, %v1978
    %v2081 = vpack.c.b16 %v1981, %v1980
    %v2082 = vpack.c.b16 %v1983, %v1982
    %v2083 = vpack.c.b16 %v1985, %v1984
    %v2084 = vpack.c.b16 %v1987, %v1986
    %v2085 = vpack.c.b16 %v1989, %v1988
    %v2086 = vpack.c.b16 %v1991, %v1990
    %v2087 = vpack.c.b16 %v1993, %v1992
    %v2088 = vpack.c.b16 %v1995, %v1994
    %v2089 = vpack.c.b16 %v1997, %v1996
    %v2090 = vpack.c.b16 %v1999, %v1998
    %v2091 = vpack.c.b16 %v2001, %v2000
    %v2092 = vpack.c.b16 %v2003, %v2002
    %v2093 = vpack.c.b16 %v2005, %v2004
    %v2094 = vpack.c.b16 %v2007, %v2006
    %v2095 = vpack.c.b16 %v2009, %v2008
    %v2096 = vpack.c.b16 %v2011, %v2010
    %v2097 = vpack.c.b16 %v2013, %v2012
    %v2098 = vpack.c.b16 %v2015, %v2014
    %v2099 = vpack.c.b16 %v2017, %v2016
    %v2100 = vpack.c.b16 %v2019, %v2018
    %v2101 = vpack.c.b16 %v2021, %v2020
    %v2102 = vpack.c.b16 %v2023, %v2022
    %v2103 = vpack.c.b16 %v2025, %v2024
    %v2104 = vpack.c.b16 %v2027, %v2026
    %v2105 = vpack.c.b16 %v2029, %v2028
    %v2106 = vpack.c.b16 %v2031, %v2030
    %v2107 = vpack.c.b16 %v2033, %v2032
    %v2108 = vpack.c.b16 %v2035, %v2034
    %v2109 = vpack.c.b16 %v2037, %v2036
    %v2110 = vpack.c.b16 %v2039, %v2038
    %v2111 = vpack.c.b16 %v2041, %v2040
    %v2112 = vpack.c.b16 %v2043, %v2042
    %v2113 = vpack.c.b16 %v2045, %v2044
    %v2114 = vpack.c.b16 %v2047, %v2046
    %v2115 = vpack.c.b16 %v2049, %v2048
    %v2116 = vpack.c.b16 %v2051, %v2050
    %v2117 = vpack.c.b16 %v2053, %v2052
    %2182 = vmatprep.subr.bf16.mxu0 0
    %2183 = vmatpush1.bf16.msra.mxu0 %v2061
    %2184 = vmatprep.subr.bf16.mxu0 0
    %2185 = vmatpush1.bf16.msra.mxu0 %v2060
    %2186 = vmatprep.subr.bf16.mxu0 0
    %2187 = vmatpush1.bf16.msra.mxu0 %v2059
    %2188 = vmatprep.subr.bf16.mxu0 0
    %2189 = vmatpush1.bf16.msra.mxu0 %v2058
    %2190 = vmatprep.subr.bf16.mxu0 0
    %2191 = vmatpush1.bf16.msra.mxu0 %v2057
    %2192 = vmatprep.subr.bf16.mxu0 0
    %2193 = vmatpush1.bf16.msra.mxu0 %v2056
    %2194 = vmatprep.subr.bf16.mxu0 0
    %2195 = vmatpush1.bf16.msra.mxu0 %v2055
    %2196 = vmatprep.subr.bf16.mxu0 0
    %2197 = vmatpush1.bf16.msra.mxu0 %v2054
    %2198 = vmatprep.subr.bf16.mxu0 0
    %2199 = vmatpush2.bf16.msra.mxu0 %v2069
    %2200 = vmatprep.subr.bf16.mxu0 0
    %2201 = vmatpush2.bf16.msra.mxu0 %v2068
    %2202 = vmatprep.subr.bf16.mxu0 0
    %2203 = vmatpush2.bf16.msra.mxu0 %v2067
    %2204 = vmatprep.subr.bf16.mxu0 0
    %2205 = vmatpush2.bf16.msra.mxu0 %v2066
    %2206 = vmatprep.subr.bf16.mxu0 0
    %2207 = vmatpush2.bf16.msra.mxu0 %v2065
    %2208 = vmatprep.subr.bf16.mxu0 0
    %2209 = vmatpush2.bf16.msra.mxu0 %v2064
    %2210 = vmatprep.subr.bf16.mxu0 0
    %2211 = vmatpush2.bf16.msra.mxu0 %v2063
    %2212 = vmatprep.subr.bf16.mxu0 0
    %2213 = vmatpush2.bf16.msra.mxu0 %v2062
    %2214 = vmatprep.mubr.bf16.mxu0 %v1560
    %2215 = vmatmul.mubr.bf16.gmra.mxu0 %v1559
    %v2216 = vpop.f32.mrf.mxu0
    %v2217 = vadd.f32 %v1796, %v2216
    %v2218 = vpop.f32.mrf.mxu0
    %v2219 = vpop.f32.mrf.mxu0
    %v2220 = vadd.f32 %v1796, %v2219
    %v2221 = vpop.f32.mrf.mxu0
    %2222 = vmatprep.mubr.bf16.mxu0 %v1568
    %2223 = vmatmul.mubr.bf16.gmra.mxu0 %v1567
    %v2224 = vpop.f32.mrf.mxu0
    %v2225 = vadd.f32 %v1796, %v2224
    %v2226 = vpop.f32.mrf.mxu0
    %v2227 = vpop.f32.mrf.mxu0
    %v2228 = vadd.f32 %v1796, %v2227
    %v2229 = vpop.f32.mrf.mxu0
    %2230 = vmatprep.mubr.bf16.mxu0 %v1576
    %2231 = vmatmul.mubr.bf16.gmra.mxu0 %v1575
    %v2232 = vpop.f32.mrf.mxu0
    %v2233 = vadd.f32 %v1796, %v2232
    %v2234 = vpop.f32.mrf.mxu0
    %v2235 = vpop.f32.mrf.mxu0
    %v2236 = vadd.f32 %v1796, %v2235
    %v2237 = vpop.f32.mrf.mxu0
    %2238 = vmatprep.mubr.bf16.mxu0 %v1584
    %2239 = vmatmul.mubr.bf16.gmra.mxu0 %v1583
    %v2240 = vpop.f32.mrf.mxu0
    %v2241 = vadd.f32 %v1796, %v2240
    %v2242 = vpop.f32.mrf.mxu0
    %v2243 = vpop.f32.mrf.mxu0
    %v2244 = vadd.f32 %v1796, %v2243
    %v2245 = vpop.f32.mrf.mxu0
    %2246 = vmatprep.mubr.bf16.mxu0 %v1592
    %2247 = vmatmul.mubr.bf16.gmra.mxu0 %v1591
    %v2248 = vpop.f32.mrf.mxu0
    %v2249 = vadd.f32 %v1796, %v2248
    %v2250 = vpop.f32.mrf.mxu0
    %v2251 = vpop.f32.mrf.mxu0
    %v2252 = vadd.f32 %v1796, %v2251
    %v2253 = vpop.f32.mrf.mxu0
    %2254 = vmatprep.mubr.bf16.mxu0 %v1600
    %2255 = vmatmul.mubr.bf16.gmra.mxu0 %v1599
    %v2256 = vpop.f32.mrf.mxu0
    %v2257 = vadd.f32 %v1796, %v2256
    %v2258 = vpop.f32.mrf.mxu0
    %v2259 = vpop.f32.mrf.mxu0
    %v2260 = vadd.f32 %v1796, %v2259
    %v2261 = vpop.f32.mrf.mxu0
    %2262 = vmatprep.mubr.bf16.mxu0 %v1608
    %2263 = vmatmul.mubr.bf16.gmra.mxu0 %v1607
    %v2264 = vpop.f32.mrf.mxu0
    %v2265 = vadd.f32 %v1796, %v2264
    %v2266 = vpop.f32.mrf.mxu0
    %v2267 = vpop.f32.mrf.mxu0
    %v2268 = vadd.f32 %v1796, %v2267
    %v2269 = vpop.f32.mrf.mxu0
    %2270 = vmatprep.mubr.bf16.mxu0 %v1616
    %2271 = vmatmul.mubr.bf16.gmra.mxu0 %v1615
    %v2272 = vpop.f32.mrf.mxu0
    %v2273 = vadd.f32 %v1796, %v2272
    %v2274 = vpop.f32.mrf.mxu0
    %v2275 = vpop.f32.mrf.mxu0
    %v2276 = vadd.f32 %v1796, %v2275
    %v2277 = vpop.f32.mrf.mxu0
    %2278 = vmatprep.mubr.bf16.mxu0 %v1624
    %2279 = vmatmul.mubr.bf16.gmra.mxu0 %v1623
    %v2280 = vpop.f32.mrf.mxu0
    %v2281 = vadd.f32 %v1796, %v2280
    %v2282 = vpop.f32.mrf.mxu0
    %v2283 = vpop.f32.mrf.mxu0
    %v2284 = vadd.f32 %v1796, %v2283
    %v2285 = vpop.f32.mrf.mxu0
    %2286 = vmatprep.mubr.bf16.mxu0 %v1632
    %2287 = vmatmul.mubr.bf16.gmra.mxu0 %v1631
    %v2288 = vpop.f32.mrf.mxu0
    %v2289 = vadd.f32 %v1796, %v2288
    %v2290 = vpop.f32.mrf.mxu0
    %v2291 = vpop.f32.mrf.mxu0
    %v2292 = vadd.f32 %v1796, %v2291
    %v2293 = vpop.f32.mrf.mxu0
    %2294 = vmatprep.mubr.bf16.mxu0 %v1640
    %2295 = vmatmul.mubr.bf16.gmra.mxu0 %v1639
    %v2296 = vpop.f32.mrf.mxu0
    %v2297 = vadd.f32 %v1796, %v2296
    %v2298 = vpop.f32.mrf.mxu0
    %v2299 = vpop.f32.mrf.mxu0
    %v2300 = vadd.f32 %v1796, %v2299
    %v2301 = vpop.f32.mrf.mxu0
    %2302 = vmatprep.mubr.bf16.mxu0 %v1648
    %2303 = vmatmul.mubr.bf16.gmra.mxu0 %v1647
    %v2304 = vpop.f32.mrf.mxu0
    %v2305 = vadd.f32 %v1796, %v2304
    %v2306 = vpop.f32.mrf.mxu0
    %v2307 = vpop.f32.mrf.mxu0
    %v2308 = vadd.f32 %v1796, %v2307
    %v2309 = vpop.f32.mrf.mxu0
    %2310 = vmatprep.mubr.bf16.mxu0 %v1656
    %2311 = vmatmul.mubr.bf16.gmra.mxu0 %v1655
    %v2312 = vpop.f32.mrf.mxu0
    %v2313 = vadd.f32 %v1796, %v2312
    %v2314 = vpop.f32.mrf.mxu0
    %v2315 = vpop.f32.mrf.mxu0
    %v2316 = vpop.f32.mrf.mxu0
    %2317 = vdwg.mxu0
    %2318 = vmatprep.subr.bf16.mxu0 0
    %2319 = vmatpush1.bf16.msra.mxu0 %v2077
    %2320 = vmatprep.subr.bf16.mxu0 0
    %2321 = vmatpush1.bf16.msra.mxu0 %v2076
    %2322 = vmatprep.subr.bf16.mxu0 0
    %2323 = vmatpush1.bf16.msra.mxu0 %v2075
    %2324 = vmatprep.subr.bf16.mxu0 0
    %2325 = vmatpush1.bf16.msra.mxu0 %v2074
    %2326 = vmatprep.subr.bf16.mxu0 0
    %2327 = vmatpush1.bf16.msra.mxu0 %v2073
    %2328 = vmatprep.subr.bf16.mxu0 0
    %2329 = vmatpush1.bf16.msra.mxu0 %v2072
    %2330 = vmatprep.subr.bf16.mxu0 0
    %2331 = vmatpush1.bf16.msra.mxu0 %v2071
    %2332 = vmatprep.subr.bf16.mxu0 0
    %2333 = vmatpush1.bf16.msra.mxu0 %v2070
    %2334 = vmatprep.subr.bf16.mxu0 0
    %2335 = vmatpush2.bf16.msra.mxu0 %v2085
    %2336 = vmatprep.subr.bf16.mxu0 0
    %2337 = vmatpush2.bf16.msra.mxu0 %v2084
    %2338 = vmatprep.subr.bf16.mxu0 0
    %2339 = vmatpush2.bf16.msra.mxu0 %v2083
    %2340 = vmatprep.subr.bf16.mxu0 0
    %2341 = vmatpush2.bf16.msra.mxu0 %v2082
    %2342 = vmatprep.subr.bf16.mxu0 0
    %2343 = vmatpush2.bf16.msra.mxu0 %v2081
    %2344 = vmatprep.subr.bf16.mxu0 0
    %2345 = vmatpush2.bf16.msra.mxu0 %v2080
    %2346 = vmatprep.subr.bf16.mxu0 0
    %2347 = vmatpush2.bf16.msra.mxu0 %v2079
    %2348 = vmatprep.subr.bf16.mxu0 0
    %2349 = vmatpush2.bf16.msra.mxu0 %v2078
    %2350 = vmatprep.mubr.bf16.mxu0 %v1562
    %2351 = vmatmul.mubr.bf16.gmra.mxu0 %v1561
    %v2352 = vpop.f32.mrf.mxu0
    %v2353 = vadd.f32 %v2217, %v2352
    %v2354 = vpop.f32.mrf.mxu0
    %v2355 = vpop.f32.mrf.mxu0
    %v2356 = vadd.f32 %v2220, %v2355
    %v2357 = vpop.f32.mrf.mxu0
    %2358 = vmatprep.mubr.bf16.mxu0 %v1570
    %2359 = vmatmul.mubr.bf16.gmra.mxu0 %v1569
    %v2360 = vpop.f32.mrf.mxu0
    %v2361 = vadd.f32 %v2225, %v2360
    %v2362 = vpop.f32.mrf.mxu0
    %v2363 = vpop.f32.mrf.mxu0
    %v2364 = vadd.f32 %v2228, %v2363
    %v2365 = vpop.f32.mrf.mxu0
    %2366 = vmatprep.mubr.bf16.mxu0 %v1578
    %2367 = vmatmul.mubr.bf16.gmra.mxu0 %v1577
    %v2368 = vpop.f32.mrf.mxu0
    %v2369 = vadd.f32 %v2233, %v2368
    %v2370 = vpop.f32.mrf.mxu0
    %v2371 = vpop.f32.mrf.mxu0
    %v2372 = vadd.f32 %v2236, %v2371
    %v2373 = vpop.f32.mrf.mxu0
    %2374 = vmatprep.mubr.bf16.mxu0 %v1586
    %2375 = vmatmul.mubr.bf16.gmra.mxu0 %v1585
    %v2376 = vpop.f32.mrf.mxu0
    %v2377 = vadd.f32 %v2241, %v2376
    %v2378 = vpop.f32.mrf.mxu0
    %v2379 = vpop.f32.mrf.mxu0
    %v2380 = vadd.f32 %v2244, %v2379
    %v2381 = vpop.f32.mrf.mxu0
    %2382 = vmatprep.mubr.bf16.mxu0 %v1594
    %2383 = vmatmul.mubr.bf16.gmra.mxu0 %v1593
    %v2384 = vpop.f32.mrf.mxu0
    %v2385 = vadd.f32 %v2249, %v2384
    %v2386 = vpop.f32.mrf.mxu0
    %v2387 = vpop.f32.mrf.mxu0
    %v2388 = vadd.f32 %v2252, %v2387
    %v2389 = vpop.f32.mrf.mxu0
    %2390 = vmatprep.mubr.bf16.mxu0 %v1602
    %2391 = vmatmul.mubr.bf16.gmra.mxu0 %v1601
    %v2392 = vpop.f32.mrf.mxu0
    %v2393 = vadd.f32 %v2257, %v2392
    %v2394 = vpop.f32.mrf.mxu0
    %v2395 = vpop.f32.mrf.mxu0
    %v2396 = vadd.f32 %v2260, %v2395
    %v2397 = vpop.f32.mrf.mxu0
    %2398 = vmatprep.mubr.bf16.mxu0 %v1610
    %2399 = vmatmul.mubr.bf16.gmra.mxu0 %v1609
    %v2400 = vpop.f32.mrf.mxu0
    %v2401 = vadd.f32 %v2265, %v2400
    %v2402 = vpop.f32.mrf.mxu0
    %v2403 = vpop.f32.mrf.mxu0
    %v2404 = vadd.f32 %v2268, %v2403
    %v2405 = vpop.f32.mrf.mxu0
    %2406 = vmatprep.mubr.bf16.mxu0 %v1618
    %2407 = vmatmul.mubr.bf16.gmra.mxu0 %v1617
    %v2408 = vpop.f32.mrf.mxu0
    %v2409 = vadd.f32 %v2273, %v2408
    %v2410 = vpop.f32.mrf.mxu0
    %v2411 = vpop.f32.mrf.mxu0
    %v2412 = vadd.f32 %v2276, %v2411
    %v2413 = vpop.f32.mrf.mxu0
    %2414 = vmatprep.mubr.bf16.mxu0 %v1626
    %2415 = vmatmul.mubr.bf16.gmra.mxu0 %v1625
    %v2416 = vpop.f32.mrf.mxu0
    %v2417 = vadd.f32 %v2281, %v2416
    %v2418 = vpop.f32.mrf.mxu0
    %v2419 = vpop.f32.mrf.mxu0
    %v2420 = vadd.f32 %v2284, %v2419
    %v2421 = vpop.f32.mrf.mxu0
    %2422 = vmatprep.mubr.bf16.mxu0 %v1634
    %2423 = vmatmul.mubr.bf16.gmra.mxu0 %v1633
    %v2424 = vpop.f32.mrf.mxu0
    %v2425 = vadd.f32 %v2289, %v2424
    %v2426 = vpop.f32.mrf.mxu0
    %v2427 = vpop.f32.mrf.mxu0
    %v2428 = vadd.f32 %v2292, %v2427
    %v2429 = vpop.f32.mrf.mxu0
    %2430 = vmatprep.mubr.bf16.mxu0 %v1642
    %2431 = vmatmul.mubr.bf16.gmra.mxu0 %v1641
    %v2432 = vpop.f32.mrf.mxu0
    %v2433 = vadd.f32 %v2297, %v2432
    %v2434 = vpop.f32.mrf.mxu0
    %v2435 = vpop.f32.mrf.mxu0
    %v2436 = vadd.f32 %v2300, %v2435
    %v2437 = vpop.f32.mrf.mxu0
    %2438 = vmatprep.mubr.bf16.mxu0 %v1650
    %2439 = vmatmul.mubr.bf16.gmra.mxu0 %v1649
    %v2440 = vpop.f32.mrf.mxu0
    %v2441 = vadd.f32 %v2305, %v2440
    %v2442 = vpop.f32.mrf.mxu0
    %v2443 = vpop.f32.mrf.mxu0
    %v2444 = vadd.f32 %v2308, %v2443
    %v2445 = vpop.f32.mrf.mxu0
    %2446 = vmatprep.mubr.bf16.mxu0 %v1658
    %2447 = vmatmul.mubr.bf16.gmra.mxu0 %v1657
    %v2448 = vpop.f32.mrf.mxu0
    %v2449 = vadd.f32 %v2313, %v2448
    %v2450 = vpop.f32.mrf.mxu0
    %v2451 = vpop.f32.mrf.mxu0
    %v2452 = vpop.f32.mrf.mxu0
    %2453 = vdwg.mxu0
    %2454 = vmatprep.subr.bf16.mxu0 0
    %2455 = vmatpush1.bf16.msra.mxu0 %v2093
    %2456 = vmatprep.subr.bf16.mxu0 0
    %2457 = vmatpush1.bf16.msra.mxu0 %v2092
    %2458 = vmatprep.subr.bf16.mxu0 0
    %2459 = vmatpush1.bf16.msra.mxu0 %v2091
    %2460 = vmatprep.subr.bf16.mxu0 0
    %2461 = vmatpush1.bf16.msra.mxu0 %v2090
    %2462 = vmatprep.subr.bf16.mxu0 0
    %2463 = vmatpush1.bf16.msra.mxu0 %v2089
    %2464 = vmatprep.subr.bf16.mxu0 0
    %2465 = vmatpush1.bf16.msra.mxu0 %v2088
    %2466 = vmatprep.subr.bf16.mxu0 0
    %2467 = vmatpush1.bf16.msra.mxu0 %v2087
    %2468 = vmatprep.subr.bf16.mxu0 0
    %2469 = vmatpush1.bf16.msra.mxu0 %v2086
    %2470 = vmatprep.subr.bf16.mxu0 0
    %2471 = vmatpush2.bf16.msra.mxu0 %v2101
    %2472 = vmatprep.subr.bf16.mxu0 0
    %2473 = vmatpush2.bf16.msra.mxu0 %v2100
    %2474 = vmatprep.subr.bf16.mxu0 0
    %2475 = vmatpush2.bf16.msra.mxu0 %v2099
    %2476 = vmatprep.subr.bf16.mxu0 0
    %2477 = vmatpush2.bf16.msra.mxu0 %v2098
    %2478 = vmatprep.subr.bf16.mxu0 0
    %2479 = vmatpush2.bf16.msra.mxu0 %v2097
    %2480 = vmatprep.subr.bf16.mxu0 0
    %2481 = vmatpush2.bf16.msra.mxu0 %v2096
    %2482 = vmatprep.subr.bf16.mxu0 0
    %2483 = vmatpush2.bf16.msra.mxu0 %v2095
    %2484 = vmatprep.subr.bf16.mxu0 0
    %2485 = vmatpush2.bf16.msra.mxu0 %v2094
    %2486 = vmatprep.mubr.bf16.mxu0 %v1564
    %2487 = vmatmul.mubr.bf16.gmra.mxu0 %v1563
    %v2488 = vpop.f32.mrf.mxu0
    %v2489 = vadd.f32 %v2353, %v2488
    %v2490 = vpop.f32.mrf.mxu0
    %v2491 = vpop.f32.mrf.mxu0
    %v2492 = vadd.f32 %v2356, %v2491
    %v2493 = vpop.f32.mrf.mxu0
    %2494 = vmatprep.mubr.bf16.mxu0 %v1572
    %2495 = vmatmul.mubr.bf16.gmra.mxu0 %v1571
    %v2496 = vpop.f32.mrf.mxu0
    %v2497 = vadd.f32 %v2361, %v2496
    %v2498 = vpop.f32.mrf.mxu0
    %v2499 = vpop.f32.mrf.mxu0
    %v2500 = vadd.f32 %v2364, %v2499
    %v2501 = vpop.f32.mrf.mxu0
    %2502 = vmatprep.mubr.bf16.mxu0 %v1580
    %2503 = vmatmul.mubr.bf16.gmra.mxu0 %v1579
    %v2504 = vpop.f32.mrf.mxu0
    %v2505 = vadd.f32 %v2369, %v2504
    %v2506 = vpop.f32.mrf.mxu0
    %v2507 = vpop.f32.mrf.mxu0
    %v2508 = vadd.f32 %v2372, %v2507
    %v2509 = vpop.f32.mrf.mxu0
    %2510 = vmatprep.mubr.bf16.mxu0 %v1588
    %2511 = vmatmul.mubr.bf16.gmra.mxu0 %v1587
    %v2512 = vpop.f32.mrf.mxu0
    %v2513 = vadd.f32 %v2377, %v2512
    %v2514 = vpop.f32.mrf.mxu0
    %v2515 = vpop.f32.mrf.mxu0
    %v2516 = vadd.f32 %v2380, %v2515
    %v2517 = vpop.f32.mrf.mxu0
    %2518 = vmatprep.mubr.bf16.mxu0 %v1596
    %2519 = vmatmul.mubr.bf16.gmra.mxu0 %v1595
    %v2520 = vpop.f32.mrf.mxu0
    %v2521 = vadd.f32 %v2385, %v2520
    %v2522 = vpop.f32.mrf.mxu0
    %v2523 = vpop.f32.mrf.mxu0
    %v2524 = vadd.f32 %v2388, %v2523
    %v2525 = vpop.f32.mrf.mxu0
    %2526 = vmatprep.mubr.bf16.mxu0 %v1604
    %2527 = vmatmul.mubr.bf16.gmra.mxu0 %v1603
    %v2528 = vpop.f32.mrf.mxu0
    %v2529 = vadd.f32 %v2393, %v2528
    %v2530 = vpop.f32.mrf.mxu0
    %v2531 = vpop.f32.mrf.mxu0
    %v2532 = vadd.f32 %v2396, %v2531
    %v2533 = vpop.f32.mrf.mxu0
    %2534 = vmatprep.mubr.bf16.mxu0 %v1612
    %2535 = vmatmul.mubr.bf16.gmra.mxu0 %v1611
    %v2536 = vpop.f32.mrf.mxu0
    %v2537 = vadd.f32 %v2401, %v2536
    %v2538 = vpop.f32.mrf.mxu0
    %v2539 = vpop.f32.mrf.mxu0
    %v2540 = vadd.f32 %v2404, %v2539
    %v2541 = vpop.f32.mrf.mxu0
    %2542 = vmatprep.mubr.bf16.mxu0 %v1620
    %2543 = vmatmul.mubr.bf16.gmra.mxu0 %v1619
    %v2544 = vpop.f32.mrf.mxu0
    %v2545 = vadd.f32 %v2409, %v2544
    %v2546 = vpop.f32.mrf.mxu0
    %v2547 = vpop.f32.mrf.mxu0
    %v2548 = vadd.f32 %v2412, %v2547
    %v2549 = vpop.f32.mrf.mxu0
    %2550 = vmatprep.mubr.bf16.mxu0 %v1628
    %2551 = vmatmul.mubr.bf16.gmra.mxu0 %v1627
    %v2552 = vpop.f32.mrf.mxu0
    %v2553 = vadd.f32 %v2417, %v2552
    %v2554 = vpop.f32.mrf.mxu0
    %v2555 = vpop.f32.mrf.mxu0
    %v2556 = vadd.f32 %v2420, %v2555
    %v2557 = vpop.f32.mrf.mxu0
    %2558 = vmatprep.mubr.bf16.mxu0 %v1636
    %2559 = vmatmul.mubr.bf16.gmra.mxu0 %v1635
    %v2560 = vpop.f32.mrf.mxu0
    %v2561 = vadd.f32 %v2425, %v2560
    %v2562 = vpop.f32.mrf.mxu0
    %v2563 = vpop.f32.mrf.mxu0
    %v2564 = vadd.f32 %v2428, %v2563
    %v2565 = vpop.f32.mrf.mxu0
    %2566 = vmatprep.mubr.bf16.mxu0 %v1644
    %2567 = vmatmul.mubr.bf16.gmra.mxu0 %v1643
    %v2568 = vpop.f32.mrf.mxu0
    %v2569 = vadd.f32 %v2433, %v2568
    %v2570 = vpop.f32.mrf.mxu0
    %v2571 = vpop.f32.mrf.mxu0
    %v2572 = vadd.f32 %v2436, %v2571
    %v2573 = vpop.f32.mrf.mxu0
    %2574 = vmatprep.mubr.bf16.mxu0 %v1652
    %2575 = vmatmul.mubr.bf16.gmra.mxu0 %v1651
    %v2576 = vpop.f32.mrf.mxu0
    %v2577 = vadd.f32 %v2441, %v2576
    %v2578 = vpop.f32.mrf.mxu0
    %v2579 = vpop.f32.mrf.mxu0
    %v2580 = vadd.f32 %v2444, %v2579
    %v2581 = vpop.f32.mrf.mxu0
    %2582 = vmatprep.mubr.bf16.mxu0 %v1660
    %2583 = vmatmul.mubr.bf16.gmra.mxu0 %v1659
    %v2584 = vpop.f32.mrf.mxu0
    %v2585 = vadd.f32 %v2449, %v2584
    %v2586 = vpop.f32.mrf.mxu0
    %v2587 = vpop.f32.mrf.mxu0
    %v2588 = vpop.f32.mrf.mxu0
    %2589 = vdwg.mxu0
    %2590 = vmatprep.subr.bf16.mxu0 0
    %2591 = vmatpush1.bf16.msra.mxu0 %v2109
    %2592 = vmatprep.subr.bf16.mxu0 0
    %2593 = vmatpush1.bf16.msra.mxu0 %v2108
    %2594 = vmatprep.subr.bf16.mxu0 0
    %2595 = vmatpush1.bf16.msra.mxu0 %v2107
    %2596 = vmatprep.subr.bf16.mxu0 0
    %2597 = vmatpush1.bf16.msra.mxu0 %v2106
    %2598 = vmatprep.subr.bf16.mxu0 0
    %2599 = vmatpush1.bf16.msra.mxu0 %v2105
    %2600 = vmatprep.subr.bf16.mxu0 0
    %2601 = vmatpush1.bf16.msra.mxu0 %v2104
    %2602 = vmatprep.subr.bf16.mxu0 0
    %2603 = vmatpush1.bf16.msra.mxu0 %v2103
    %2604 = vmatprep.subr.bf16.mxu0 0
    %2605 = vmatpush1.bf16.msra.mxu0 %v2102
    %2606 = vmatprep.subr.bf16.mxu0 0
    %2607 = vmatpush2.bf16.msra.mxu0 %v2117
    %2608 = vmatprep.subr.bf16.mxu0 0
    %2609 = vmatpush2.bf16.msra.mxu0 %v2116
    %2610 = vmatprep.subr.bf16.mxu0 0
    %2611 = vmatpush2.bf16.msra.mxu0 %v2115
    %2612 = vmatprep.subr.bf16.mxu0 0
    %2613 = vmatpush2.bf16.msra.mxu0 %v2114
    %2614 = vmatprep.subr.bf16.mxu0 0
    %2615 = vmatpush2.bf16.msra.mxu0 %v2113
    %2616 = vmatprep.subr.bf16.mxu0 0
    %2617 = vmatpush2.bf16.msra.mxu0 %v2112
    %2618 = vmatprep.subr.bf16.mxu0 0
    %2619 = vmatpush2.bf16.msra.mxu0 %v2111
    %2620 = vmatprep.subr.bf16.mxu0 0
    %2621 = vmatpush2.bf16.msra.mxu0 %v2110
    %2622 = vmatprep.mubr.bf16.mxu0 %v1566
    %2623 = vmatmul.mubr.bf16.gmra.mxu0 %v1565
    %v2624 = vpop.f32.mrf.mxu0
    %v2625 = vadd.f32 %v2489, %v2624
    %v2626 = vpop.f32.mrf.mxu0
    %v2627 = vpop.f32.mrf.mxu0
    %v2628 = vadd.f32 %v2492, %v2627
    %v2629 = vpop.f32.mrf.mxu0
    %2630 = vmatprep.mubr.bf16.mxu0 %v1574
    %2631 = vmatmul.mubr.bf16.gmra.mxu0 %v1573
    %v2632 = vpop.f32.mrf.mxu0
    %v2633 = vadd.f32 %v2497, %v2632
    %v2634 = vpop.f32.mrf.mxu0
    %v2635 = vpop.f32.mrf.mxu0
    %v2636 = vadd.f32 %v2500, %v2635
    %v2637 = vpop.f32.mrf.mxu0
    %2638 = vmatprep.mubr.bf16.mxu0 %v1582
    %2639 = vmatmul.mubr.bf16.gmra.mxu0 %v1581
    %v2640 = vpop.f32.mrf.mxu0
    %v2641 = vadd.f32 %v2505, %v2640
    %v2642 = vpop.f32.mrf.mxu0
    %v2643 = vpop.f32.mrf.mxu0
    %v2644 = vadd.f32 %v2508, %v2643
    %v2645 = vpop.f32.mrf.mxu0
    %2646 = vmatprep.mubr.bf16.mxu0 %v1590
    %2647 = vmatmul.mubr.bf16.gmra.mxu0 %v1589
    %v2648 = vpop.f32.mrf.mxu0
    %v2649 = vadd.f32 %v2513, %v2648
    %v2650 = vpop.f32.mrf.mxu0
    %v2651 = vpop.f32.mrf.mxu0
    %v2652 = vadd.f32 %v2516, %v2651
    %v2653 = vpop.f32.mrf.mxu0
    %2654 = vmatprep.mubr.bf16.mxu0 %v1598
    %2655 = vmatmul.mubr.bf16.gmra.mxu0 %v1597
    %v2656 = vpop.f32.mrf.mxu0
    %v2657 = vadd.f32 %v2521, %v2656
    %v2658 = vpop.f32.mrf.mxu0
    %v2659 = vpop.f32.mrf.mxu0
    %v2660 = vadd.f32 %v2524, %v2659
    %v2661 = vpop.f32.mrf.mxu0
    %2662 = vmatprep.mubr.bf16.mxu0 %v1606
    %2663 = vmatmul.mubr.bf16.gmra.mxu0 %v1605
    %v2664 = vpop.f32.mrf.mxu0
    %v2665 = vadd.f32 %v2529, %v2664
    %v2666 = vpop.f32.mrf.mxu0
    %v2667 = vpop.f32.mrf.mxu0
    %v2668 = vadd.f32 %v2532, %v2667
    %v2669 = vpop.f32.mrf.mxu0
    %2670 = vmatprep.mubr.bf16.mxu0 %v1614
    %2671 = vmatmul.mubr.bf16.gmra.mxu0 %v1613
    %v2672 = vpop.f32.mrf.mxu0
    %v2673 = vadd.f32 %v2537, %v2672
    %v2674 = vpop.f32.mrf.mxu0
    %v2675 = vpop.f32.mrf.mxu0
    %v2676 = vadd.f32 %v2540, %v2675
    %v2677 = vpop.f32.mrf.mxu0
    %2678 = vmatprep.mubr.bf16.mxu0 %v1622
    %2679 = vmatmul.mubr.bf16.gmra.mxu0 %v1621
    %v2680 = vpop.f32.mrf.mxu0
    %v2681 = vadd.f32 %v2545, %v2680
    %v2682 = vpop.f32.mrf.mxu0
    %v2683 = vpop.f32.mrf.mxu0
    %v2684 = vadd.f32 %v2548, %v2683
    %v2685 = vpop.f32.mrf.mxu0
    %2686 = vmatprep.mubr.bf16.mxu0 %v1630
    %2687 = vmatmul.mubr.bf16.gmra.mxu0 %v1629
    %v2688 = vpop.f32.mrf.mxu0
    %v2689 = vadd.f32 %v2553, %v2688
    %v2690 = vpop.f32.mrf.mxu0
    %v2691 = vpop.f32.mrf.mxu0
    %v2692 = vadd.f32 %v2556, %v2691
    %v2693 = vpop.f32.mrf.mxu0
    %2694 = vmatprep.mubr.bf16.mxu0 %v1638
    %2695 = vmatmul.mubr.bf16.gmra.mxu0 %v1637
    %v2696 = vpop.f32.mrf.mxu0
    %v2697 = vadd.f32 %v2561, %v2696
    %v2698 = vpop.f32.mrf.mxu0
    %v2699 = vpop.f32.mrf.mxu0
    %v2700 = vadd.f32 %v2564, %v2699
    %v2701 = vpop.f32.mrf.mxu0
    %2702 = vmatprep.mubr.bf16.mxu0 %v1646
    %2703 = vmatmul.mubr.bf16.gmra.mxu0 %v1645
    %v2704 = vpop.f32.mrf.mxu0
    %v2705 = vadd.f32 %v2569, %v2704
    %v2706 = vpop.f32.mrf.mxu0
    %v2707 = vpop.f32.mrf.mxu0
    %v2708 = vadd.f32 %v2572, %v2707
    %v2709 = vpop.f32.mrf.mxu0
    %2710 = vmatprep.mubr.bf16.mxu0 %v1654
    %2711 = vmatmul.mubr.bf16.gmra.mxu0 %v1653
    %v2712 = vpop.f32.mrf.mxu0
    %v2713 = vadd.f32 %v2577, %v2712
    %v2714 = vpop.f32.mrf.mxu0
    %v2715 = vpop.f32.mrf.mxu0
    %v2716 = vadd.f32 %v2580, %v2715
    %v2717 = vpop.f32.mrf.mxu0
    %2718 = vmatprep.mubr.bf16.mxu0 %v1662
    %2719 = vmatmul.mubr.bf16.gmra.mxu0 %v1661
    %v2720 = vpop.f32.mrf.mxu0
    %v2721 = vadd.f32 %v2585, %v2720
    %v2722 = vpop.f32.mrf.mxu0
    %v2723 = vpop.f32.mrf.mxu0
    %v2724 = vpop.f32.mrf.mxu0
    %2725 = vdwg.mxu0
    %2726 = vst [vmem:[%s5] sm:$0xff] %v2625
    %2727 = vst [vmem:[%s5 + $0x8] sm:$0xff] %v2628
    %2728 = vst [vmem:[%s5 + $0x10] sm:$0xff] %v2633
    %2729 = vst [vmem:[%s5 + $0x18] sm:$0xff] %v2636
    %2730 = vst [vmem:[%s5 + $0x20] sm:$0xff] %v2641
    %2731 = vst [vmem:[%s5 + $0x28] sm:$0xff] %v2644
    %2732 = vst [vmem:[%s5 + $0x30] sm:$0xff] %v2649
    %2733 = vst [vmem:[%s5 + $0x38] sm:$0xff] %v2652
    %2734 = vst [vmem:[%s5 + $0x40] sm:$0xff] %v2657
    %2735 = vst [vmem:[%s5 + $0x48] sm:$0xff] %v2660
    %2736 = vst [vmem:[%s5 + $0x50] sm:$0xff] %v2665
    %2737 = vst [vmem:[%s5 + $0x58] sm:$0xff] %v2668
    %2738 = vst [vmem:[%s5 + $0x60] sm:$0xff] %v2673
    %2739 = vst [vmem:[%s5 + $0x68] sm:$0xff] %v2676
    %2740 = vst [vmem:[%s5 + $0x70] sm:$0xff] %v2681
    %2741 = vst [vmem:[%s5 + $0x78] sm:$0xff] %v2684
    %2742 = vst [vmem:[%s5 + $0x80] sm:$0xff] %v2689
    %2743 = vst [vmem:[%s5 + $0x88] sm:$0xff] %v2692
    %2744 = vst [vmem:[%s5 + $0x90] sm:$0xff] %v2697
    %2745 = vst [vmem:[%s5 + $0x98] sm:$0xff] %v2700
    %2746 = vst [vmem:[%s5 + $0xa0] sm:$0xff] %v2705
    %2747 = vst [vmem:[%s5 + $0xa8] sm:$0xff] %v2708
    %2748 = vst [vmem:[%s5 + $0xb0] sm:$0xff] %v2713
    %2749 = vst [vmem:[%s5 + $0xb8] sm:$0xff] %v2716
    %2750 = vst [vmem:[%s5 + $0xc0] sm:$0xff] %v2721
    // Predicated region
    $region38: #{_lambda_.1} parent=1 // pred_check
      _
    $region39: #{_lambda_.1} parent=1 // pred_check_branch
      %2752 = sbr.rel (0) target = $region41
    $region40: #{_lambda_.1} parent=1 // pred_region
      _
    $region41: #{_lambda_.1} parent=1 // pred_fallthru
      _
    // Predicated region
    $region42: #{_lambda_.1} parent=1 // pred_check
      _
    $region43: #{_lambda_.1} parent=1 // pred_check_branch
      %2754 = sbr.rel (0) target = $region45
    $region44: #{_lambda_.1} parent=1 // pred_region
      _
    $region45: #{_lambda_.1} parent=1 // pred_fallthru
      _
    %2755 = vsyncpa [#allocation3], 1
    %2756 = vsyncpa [#allocation5], 1
    %2757 = vsyncpa [#allocation8], 1

</llo_original>
